<compile_context>
chip_gen: v7x
topology: tpu7x:2x2x1
jax: 0.10.0
libtpu: 0.0.40
codegen_flags: <defaults>
</compile_context>

<pallas_src>
import math
from functools import partial

import jax
import jax.numpy as jnp
from jax.experimental import pallas as pl
from jax.experimental.pallas import tpu as pltpu


def _attention_layer_kernel(D, eps):
    """Returns the kernel body; all operands are pre-merged to 2-D."""

    def kernel(x_ref, wqkv_ref, wfc_ref, bias_ref, o_ref):
        # x_ref    : (R, D)  f32, R = B*H*S   (merged batch*heads*seq rows)
        # wqkv_ref : (D, 3D) f32, [W_Q.T / sqrt(d_k) | W_K.T | W_V.T]
        # wfc_ref  : (D, D)  f32, W_fc.T
        # bias_ref : (R, R)  f32, 0 on the per-(batch,head) SxS diagonal
        #                         blocks, -1e30 elsewhere.
        x = x_ref[...]

        # Fused QKV projection: one MXU matmul; 1/sqrt(d_k) already folded in.
        qkv = jnp.dot(x, wqkv_ref[...],
                      preferred_element_type=jnp.float32,
                      precision=jax.lax.Precision.HIGHEST)          # (R, 3D)
        q = qkv[:, 0 * D:1 * D]
        k = qkv[:, 1 * D:2 * D]
        v = qkv[:, 2 * D:3 * D]

        # Merged-head scores: one (R, R) matmul (Q @ K^T, contraction over D),
        # plus the block-diagonal bias applied BEFORE the row-max subtraction
        # so softmax never mixes probability across heads.
        scores = jax.lax.dot_general(
            q, k, (((1,), (1,)), ((), ())),
            preferred_element_type=jnp.float32,
            precision=jax.lax.Precision.HIGHEST)                    # (R, R)
        scores = scores + bias_ref[...]

        # Numerically-stable softmax over the last axis (exact f32 math).
        scores = scores - jnp.max(scores, axis=-1, keepdims=True)
        e = jnp.exp(scores)
        attn = e / jnp.sum(e, axis=-1, keepdims=True)

        # Context and output projection (still single 2-D matmuls).
        ctx = jnp.dot(attn, v,
                      preferred_element_type=jnp.float32,
                      precision=jax.lax.Precision.HIGHEST)          # (R, D)
        out = jnp.dot(ctx, wfc_ref[...],
                      preferred_element_type=jnp.float32,
                      precision=jax.lax.Precision.HIGHEST)          # (R, D)

        # Residual + LayerNorm over the last dim (gamma=1, beta=0).
        y = out + x
        mean = jnp.mean(y, axis=-1, keepdims=True)
        d = y - mean
        var = jnp.mean(d * d, axis=-1, keepdims=True)
        o_ref[...] = (d * jax.lax.rsqrt(var + eps)).astype(o_ref.dtype)

    return kernel


def prepare_attention_params(w_q, w_k, w_v, w_fc, d_k, batch, n_heads, seq_len):
    """One-time (init-time) parameter prep — hoisted out of the per-call hot path."""
    scale = jnp.float32(1.0 / math.sqrt(d_k))
    w_qkv = jnp.concatenate(
        [w_q.T * scale, w_k.T, w_v.T], axis=1).astype(jnp.float32)     # (D, 3D)
    w_fc_t = w_fc.T.astype(jnp.float32)                                # (D, D)

    # Block-diagonal additive bias: 0 inside each (batch, head) SxS block,
    # a large negative value elsewhere (exp underflows to exactly 0 in f32).
    R = batch * n_heads * seq_len
    blk = jnp.arange(R, dtype=jnp.int32) // seq_len
    bias = jnp.where(blk[:, None] == blk[None, :],
                     jnp.float32(0.0), jnp.float32(-1e30))             # (R, R)
    return w_qkv, w_fc_t, bias


@partial(jax.jit, static_argnames=("eps",))
def attention_layer_b(x, w_qkv, w_fc_t, bias, eps=1e-5):
    """x: [B, H, S, D] f32; (w_qkv, w_fc_t, bias) from prepare_attention_params()."""
    B, H, S, D = x.shape
    R = B * H * S
    x2 = x.reshape(R, D)   # layout-free flatten done in the wrapper

    out = pl.pallas_call(
        _attention_layer_kernel(D, eps),
        out_shape=jax.ShapeDtypeStruct((R, D), x.dtype),
        # Single grid step: the whole problem fits trivially in VMEM on
        # v5e/v6e/v7x, and one step avoids paying the per-step pipeline
        # prologue several times (which dominated wall time at this size).
        grid=(1,),
        in_specs=[
            pl.BlockSpec((R, D), lambda i: (0, 0)),
            pl.BlockSpec((D, 3 * D), lambda i: (0, 0)),
            pl.BlockSpec((D, D), lambda i: (0, 0)),
            pl.BlockSpec((R, R), lambda i: (0, 0)),
        ],
        out_specs=pl.BlockSpec((R, D), lambda i: (0, 0)),
        compiler_params=pltpu.CompilerParams(
            dimension_semantics=("arbitrary",)),
    )(x2, w_qkv, w_fc_t, bias)

    return out.reshape(B, H, S, D)


def _reference(x, w_q, w_k, w_v, w_fc, d_k, eps=1e-5):
    """Pure-JAX f32 reference mirroring the PyTorch forward."""
    q = jnp.einsum("bhsd,ed->bhse", x, w_q)
    k = jnp.einsum("bhsd,ed->bhse", x, w_k)
    v = jnp.einsum("bhsd,ed->bhse", x, w_v)
    scores = jnp.einsum("bhqd,bhkd->bhqk", q, k) / math.sqrt(d_k)
    attn = jax.nn.softmax(scores, axis=-1)
    ctx = jnp.einsum("bhqk,bhkd->bhqd", attn, v)
    out = jnp.einsum("bhsd,ed->bhse", ctx, w_fc)
    y = out + x
    mean = jnp.mean(y, axis=-1, keepdims=True)
    var = jnp.mean((y - mean) ** 2, axis=-1, keepdims=True)
    return (y - mean) / jnp.sqrt(var + eps)


if __name__ == "__main__":
    # Keep the pure-JAX reference matmuls at full f32 accuracy so the check
    # below measures the kernel, not the reference's own truncation.
    jax.config.update("jax_default_matmul_precision", "highest")

    # Small deterministic config: hidden_units (d_model) = 32, n_heads = 2,
    # d_k = d_v = 16, input [B=2, H=2, S=8, D=32].
    B, H, S, D = 2, 2, 8, 32
    d_k = 16

    key = jax.random.PRNGKey(0)
    kx, kq, kk, kv, kf = jax.random.split(key, 5)
    x = jax.random.normal(kx, (B, H, S, D), dtype=jnp.float32)

    # nn.Linear(D, D, bias=False)-style deterministic init: U(-1/sqrt(D), 1/sqrt(D)).
    bound = 1.0 / math.sqrt(D)
    w_q = jax.random.uniform(kq, (D, D), jnp.float32, -bound, bound)
    w_k = jax.random.uniform(kk, (D, D), jnp.float32, -bound, bound)
    w_v = jax.random.uniform(kv, (D, D), jnp.float32, -bound, bound)
    w_fc = jax.random.uniform(kf, (D, D), jnp.float32, -bound, bound)

    # One-time parameter prep (init-time), not in the per-call hot path.
    w_qkv, w_fc_t, bias = prepare_attention_params(w_q, w_k, w_v, w_fc, d_k, B, H, S)

    y = attention_layer_b(x, w_qkv, w_fc_t, bias)
    y = jax.block_until_ready(y)

    y_ref = _reference(x, w_q, w_k, w_v, w_fc, d_k)
    # All kernel matmuls are f32 (Precision.HIGHEST) and softmax is exact, so
    # the kernel matches the f32 reference tightly.
    assert jnp.allclose(y, y_ref, atol=1e-4, rtol=1e-4), "mismatch vs reference"

    print("KERNEL_OK")
</pallas_src>

<mosaic_0001>
module attributes {stable_mosaic.version = 11 : i64} {
  func.func @kernel(%arg0: i32, %arg1: memref<32x32xf32, #tpu.memory_space<vmem>>, %arg2: memref<32x96xf32, #tpu.memory_space<vmem>>, %arg3: memref<32x32xf32, #tpu.memory_space<vmem>>, %arg4: memref<32x32xf32, #tpu.memory_space<vmem>>, %arg5: memref<32x32xf32, #tpu.memory_space<vmem>>) attributes {dimension_semantics = [#tpu.dimension_semantics<arbitrary>], iteration_bounds = array<i64: 1>, scalar_prefetch = 0 : i64, scratch_operands = 0 : i64, tpu.core_type = #tpu.core_type<tc>, window_params = [{pipeline_mode = #tpu.pipeline_mode<synchronous>, transform_indices = @transform_0, window_bounds = array<i64: 32, 32>}, {pipeline_mode = #tpu.pipeline_mode<synchronous>, transform_indices = @transform_1, window_bounds = array<i64: 32, 96>}, {pipeline_mode = #tpu.pipeline_mode<synchronous>, transform_indices = @transform_2, window_bounds = array<i64: 32, 32>}, {pipeline_mode = #tpu.pipeline_mode<synchronous>, transform_indices = @transform_3, window_bounds = array<i64: 32, 32>}, {pipeline_mode = #tpu.pipeline_mode<synchronous>, transform_indices = @transform_4, window_bounds = array<i64: 32, 32>}]} {
    %c0 = arith.constant 0 : index
    %c0_0 = arith.constant 0 : index
    %0 = vector.load %arg1[%c0, %c0_0] : memref<32x32xf32, #tpu.memory_space<vmem>>, vector<32x32xf32>
    %c0_1 = arith.constant 0 : index
    %c0_2 = arith.constant 0 : index
    %1 = vector.load %arg2[%c0_1, %c0_2] : memref<32x96xf32, #tpu.memory_space<vmem>>, vector<32x96xf32>
    %cst = arith.constant dense<0.000000e+00> : vector<32x96xf32>
    %2 = tpu.matmul %0, %1, %cst {dimension_numbers = #tpu.dot_dimension_numbers<[1], [0], [0], [1], [0, 0, 1, 1], [], []>, precision = #tpu.contract_precision<fp32>} : vector<32x32xf32>, vector<32x96xf32>, vector<32x96xf32> -> vector<32x96xf32>
    %3 = vector.extract_strided_slice %2 {offsets = [0, 0], sizes = [32, 32], strides = [1, 1]} : vector<32x96xf32> to vector<32x32xf32>
    %4 = vector.extract_strided_slice %2 {offsets = [0, 32], sizes = [32, 32], strides = [1, 1]} : vector<32x96xf32> to vector<32x32xf32>
    %5 = vector.extract_strided_slice %2 {offsets = [0, 64], sizes = [32, 32], strides = [1, 1]} : vector<32x96xf32> to vector<32x32xf32>
    %cst_3 = arith.constant dense<0.000000e+00> : vector<32x32xf32>
    %6 = tpu.matmul %3, %4, %cst_3 {dimension_numbers = #tpu.dot_dimension_numbers<[1], [1], [0], [0], [0, 0, 1, 0], [], []>, precision = #tpu.contract_precision<fp32>} : vector<32x32xf32>, vector<32x32xf32>, vector<32x32xf32> -> vector<32x32xf32>
    %c0_4 = arith.constant 0 : index
    %c0_5 = arith.constant 0 : index
    %7 = vector.load %arg4[%c0_4, %c0_5] : memref<32x32xf32, #tpu.memory_space<vmem>>, vector<32x32xf32>
    %8 = arith.addf %6, %7 : vector<32x32xf32>
    %cst_6 = arith.constant dense<0xFF800000> : vector<32xf32>
    %9 = vector.multi_reduction <maximumf>, %8, %cst_6 [1] : vector<32x32xf32> to vector<32xf32>
    %10 = vector.shape_cast %9 : vector<32xf32> to vector<32x1xf32>
    %11 = vector.broadcast %10 : vector<32x1xf32> to vector<32x32xf32>
    %12 = arith.subf %8, %11 : vector<32x32xf32>
    %13 = math.exp %12 : vector<32x32xf32>
    %cst_7 = arith.constant dense<0.000000e+00> : vector<32xf32>
    %14 = vector.multi_reduction <add>, %13, %cst_7 [1] : vector<32x32xf32> to vector<32xf32>
    %15 = vector.shape_cast %14 : vector<32xf32> to vector<32x1xf32>
    %16 = vector.broadcast %15 : vector<32x1xf32> to vector<32x32xf32>
    %17 = arith.divf %13, %16 : vector<32x32xf32>
    %cst_8 = arith.constant dense<0.000000e+00> : vector<32x32xf32>
    %18 = tpu.matmul %17, %5, %cst_8 {dimension_numbers = #tpu.dot_dimension_numbers<[1], [0], [0], [1], [0, 0, 1, 1], [], []>, precision = #tpu.contract_precision<fp32>} : vector<32x32xf32>, vector<32x32xf32>, vector<32x32xf32> -> vector<32x32xf32>
    %c0_9 = arith.constant 0 : index
    %c0_10 = arith.constant 0 : index
    %19 = vector.load %arg3[%c0_9, %c0_10] : memref<32x32xf32, #tpu.memory_space<vmem>>, vector<32x32xf32>
    %cst_11 = arith.constant dense<0.000000e+00> : vector<32x32xf32>
    %20 = tpu.matmul %18, %19, %cst_11 {dimension_numbers = #tpu.dot_dimension_numbers<[1], [0], [0], [1], [0, 0, 1, 1], [], []>, precision = #tpu.contract_precision<fp32>} : vector<32x32xf32>, vector<32x32xf32>, vector<32x32xf32> -> vector<32x32xf32>
    %21 = arith.addf %20, %0 : vector<32x32xf32>
    %cst_12 = arith.constant dense<0.000000e+00> : vector<32xf32>
    %22 = vector.multi_reduction <add>, %21, %cst_12 [1] : vector<32x32xf32> to vector<32xf32>
    %23 = vector.shape_cast %22 : vector<32xf32> to vector<32x1xf32>
    %cst_13 = arith.constant 3.200000e+01 : f32
    %24 = vector.broadcast %cst_13 : f32 to vector<32x1xf32>
    %25 = arith.divf %23, %24 : vector<32x1xf32>
    %26 = vector.broadcast %25 : vector<32x1xf32> to vector<32x32xf32>
    %27 = arith.subf %21, %26 : vector<32x32xf32>
    %28 = arith.mulf %27, %27 : vector<32x32xf32>
    %cst_14 = arith.constant dense<0.000000e+00> : vector<32xf32>
    %29 = vector.multi_reduction <add>, %28, %cst_14 [1] : vector<32x32xf32> to vector<32xf32>
    %30 = vector.shape_cast %29 : vector<32xf32> to vector<32x1xf32>
    %cst_15 = arith.constant 3.200000e+01 : f32
    %31 = vector.broadcast %cst_15 : f32 to vector<32x1xf32>
    %32 = arith.divf %30, %31 : vector<32x1xf32>
    %cst_16 = arith.constant 9.99999974E-6 : f32
    %33 = vector.broadcast %cst_16 : f32 to vector<32x1xf32>
    %34 = arith.addf %32, %33 : vector<32x1xf32>
    %35 = math.rsqrt %34 : vector<32x1xf32>
    %36 = vector.broadcast %35 : vector<32x1xf32> to vector<32x32xf32>
    %37 = arith.mulf %27, %36 : vector<32x32xf32>
    %c0_17 = arith.constant 0 : index
    %c0_18 = arith.constant 0 : index
    %38 = vector.load %arg5[%c0_17, %c0_18] : memref<32x32xf32, #tpu.memory_space<vmem>>, vector<32x32xf32>
    tpu.vector_store %arg5[%c0_17, %c0_18], %37 {strides = array<i32>} : memref<32x32xf32, #tpu.memory_space<vmem>>, vector<32x32xf32>,
    return
  }
  func.func @transform_0(%arg0: i32) -> (i32, i32) {
    %c0_i32 = arith.constant 0 : i32
    %c0_i32_0 = arith.constant 0 : i32
    %c0_i32_1 = arith.constant 0 : i32
    return %c0_i32, %c0_i32_0 : i32, i32
  }
  func.func @transform_1(%arg0: i32) -> (i32, i32) {
    %c0_i32 = arith.constant 0 : i32
    %c0_i32_0 = arith.constant 0 : i32
    %c0_i32_1 = arith.constant 0 : i32
    return %c0_i32, %c0_i32_0 : i32, i32
  }
  func.func @transform_2(%arg0: i32) -> (i32, i32) {
    %c0_i32 = arith.constant 0 : i32
    %c0_i32_0 = arith.constant 0 : i32
    %c0_i32_1 = arith.constant 0 : i32
    return %c0_i32, %c0_i32_0 : i32, i32
  }
  func.func @transform_3(%arg0: i32) -> (i32, i32) {
    %c0_i32 = arith.constant 0 : i32
    %c0_i32_0 = arith.constant 0 : i32
    %c0_i32_1 = arith.constant 0 : i32
    return %c0_i32, %c0_i32_0 : i32, i32
  }
  func.func @transform_4(%arg0: i32) -> (i32, i32) {
    %c0_i32 = arith.constant 0 : i32
    %c0_i32_0 = arith.constant 0 : i32
    %c0_i32_1 = arith.constant 0 : i32
    return %c0_i32, %c0_i32_0 : i32, i32
  }
}

</mosaic_0001>

<llo_original>
// kernel: attention_layer_b.1
$region0: #{attention_layer_b.1}
  #allocation0 [shape = 'u32[]', space=smem, size = 0x4, offset = 0x4, fixed_abs, tag = 'smem constant byte address 0x4 - core index']
  #allocation1 [shape = 'u32[144,128]{1,0:T(1,128)}', space=vmem, size = 0x12000, scoped, tag = 'internal scratch']
  %s0 = inlined_call_operand.hbm [shape: f32[32,32], index: 0, kind: input, shape index: {}]
  %s1 = inlined_call_operand.hbm [shape: f32[32,96], index: 1, kind: input, shape index: {}]
  %s2 = inlined_call_operand.hbm [shape: f32[32,32], index: 2, kind: input, shape index: {}]
  %s3 = inlined_call_operand.hbm [shape: f32[32,32], index: 3, kind: input, shape index: {}]
  %s4 = inlined_call_operand.hbm [shape: f32[32,32], index: 4, kind: output, shape index: {}]
  %s5 = sld [smem:[#allocation0]]
  $region42: #{attention_layer_b.1} parent=0
    _
  %s7 = ssub.s32 1, %s5
  %s8 = scalar_select 0, %s7, %s5
  $region1: #{attention_layer_b.1} parent=0
    #allocation2 [shape = 'u8[16384]{0}', space=vmem, size = 0x4000, scoped, tag = 'input window, operand 0, single buffered']
    #allocation3 [shape = 's32[1]{0}', space=sflag, size = 0x4, scoped, tag = 'scoped memory for attention_layer_b.1']
    #allocation4 [shape = 's32[1]{0}', space=sflag, size = 0x4, scoped, tag = 'scoped memory for attention_layer_b.1']
    #allocation5 [shape = 'u8[16384]{0}', space=vmem, size = 0x4000, scoped, tag = 'input window, operand 1, single buffered']
    #allocation6 [shape = 's32[1]{0}', space=sflag, size = 0x4, scoped, tag = 'scoped memory for attention_layer_b.1']
    #allocation7 [shape = 'u8[16384]{0}', space=vmem, size = 0x4000, scoped, tag = 'input window, operand 2, single buffered']
    #allocation8 [shape = 'u8[16384]{0}', space=vmem, size = 0x4000, scoped, tag = 'input window, operand 3, single buffered']
    #allocation9 [shape = 's32[1]{0}', space=sflag, size = 0x4, scoped, tag = 'scoped memory for attention_layer_b.1']
    #allocation10 [shape = 'u8[16384]{0}', space=vmem, size = 0x4000, scoped, tag = 'output window, operand 0, single buffered']
    %9 = vsyncpa [#allocation3], 0
    %10 = vsyncpa [#allocation6], 0
    %11 = vsyncpa [#allocation9], 0
    %12 = vsyncpa [#allocation4], 0
    // Predicated region
    $region2: #{attention_layer_b.1} parent=1 // pred_check
      _
    $region3: #{attention_layer_b.1} parent=1 // pred_check_branch
      %14 = sbr.rel (0) target = $region5
    $region4: #{attention_layer_b.1} parent=1 // pred_region
      %s16 = ssub.s32 512, 512
      %17 = vsyncadd [#allocation3], %s16
      %s18 = sshll.u32 [#allocation2], 4
      %s19 = int_to_ptr.vmem [resolvable:$true] %s18
      %24 = dma.hbm_to_vmem [thread:$0]  %s0, 512, %s19, [#allocation3], 128, 128, 8
    $region5: #{attention_layer_b.1} parent=1 // pred_fallthru
      _
    // Predicated region
    $region6: #{attention_layer_b.1} parent=1 // pred_check
      _
    $region7: #{attention_layer_b.1} parent=1 // pred_check_branch
      %26 = sbr.rel (0) target = $region9
    $region8: #{attention_layer_b.1} parent=1 // pred_region
      %s28 = ssub.s32 512, 512
      %29 = vsyncadd [#allocation6], %s28
      %s30 = sshll.u32 [#allocation5], 4
      %s31 = int_to_ptr.vmem [resolvable:$true] %s30
      %36 = dma.hbm_to_vmem [thread:$0]  %s1, 512, %s31, [#allocation6], 128, 128, 8
    $region9: #{attention_layer_b.1} parent=1 // pred_fallthru
      _
    // Predicated region
    $region10: #{attention_layer_b.1} parent=1 // pred_check
      _
    $region11: #{attention_layer_b.1} parent=1 // pred_check_branch
      %38 = sbr.rel (0) target = $region13
    $region12: #{attention_layer_b.1} parent=1 // pred_region
      %s40 = ssub.s32 512, 512
      %41 = vsyncadd [#allocation6], %s40
      %s42 = sshll.u32 [#allocation7], 4
      %s43 = int_to_ptr.vmem [resolvable:$true] %s42
      %48 = dma.hbm_to_vmem [thread:$0]  %s2, 512, %s43, [#allocation6], 128, 128, 8
    $region13: #{attention_layer_b.1} parent=1 // pred_fallthru
      _
    // Predicated region
    $region14: #{attention_layer_b.1} parent=1 // pred_check
      _
    $region15: #{attention_layer_b.1} parent=1 // pred_check_branch
      %50 = sbr.rel (0) target = $region17
    $region16: #{attention_layer_b.1} parent=1 // pred_region
      %s52 = ssub.s32 512, 512
      %53 = vsyncadd [#allocation9], %s52
      %s54 = sshll.u32 [#allocation8], 4
      %s55 = int_to_ptr.vmem [resolvable:$true] %s54
      %60 = dma.hbm_to_vmem [thread:$0]  %s3, 512, %s55, [#allocation9], 128, 128, 8
    $region17: #{attention_layer_b.1} parent=1 // pred_fallthru
      _
    // Predicated region
    $region18: #{attention_layer_b.1} parent=1 // pred_check
      _
    $region19: #{attention_layer_b.1} parent=1 // pred_check_branch
      %62 = sbr.rel (0) target = $region21
    $region20: #{attention_layer_b.1} parent=1 // pred_region
      %63 = dma.done [#allocation3], 512
    $region21: #{attention_layer_b.1} parent=1 // pred_fallthru
      _
    // Predicated region
    $region22: #{attention_layer_b.1} parent=1 // pred_check
      _
    $region23: #{attention_layer_b.1} parent=1 // pred_check_branch
      %65 = sbr.rel (0) target = $region25
    $region24: #{attention_layer_b.1} parent=1 // pred_region
      %66 = dma.done [#allocation6], 512
    $region25: #{attention_layer_b.1} parent=1 // pred_fallthru
      _
    // Predicated region
    $region26: #{attention_layer_b.1} parent=1 // pred_check
      _
    $region27: #{attention_layer_b.1} parent=1 // pred_check_branch
      %68 = sbr.rel (0) target = $region29
    $region28: #{attention_layer_b.1} parent=1 // pred_region
      %69 = dma.done [#allocation6], 512
    $region29: #{attention_layer_b.1} parent=1 // pred_fallthru
      _
    // Predicated region
    $region30: #{attention_layer_b.1} parent=1 // pred_check
      _
    $region31: #{attention_layer_b.1} parent=1 // pred_check_branch
      %71 = sbr.rel (0) target = $region33
    $region32: #{attention_layer_b.1} parent=1 // pred_region
      %72 = dma.done [#allocation9], 512
    $region33: #{attention_layer_b.1} parent=1 // pred_fallthru
      _
    %v73 = vld [vmem:[#allocation2] sm:$0xff]
    %v74 = vld [vmem:[#allocation2 + $0x8] sm:$0xff]
    %v75 = vld [vmem:[#allocation2 + $0x10] sm:$0xff]
    %v76 = vld [vmem:[#allocation2 + $0x18] sm:$0xff]
    %v77 = vld [vmem:[#allocation5] sm:$0xff]
    %v78 = vld [vmem:[#allocation5 + $0x8] sm:$0xff]
    %v79 = vld [vmem:[#allocation5 + $0x10] sm:$0xff]
    %v80 = vld [vmem:[#allocation5 + $0x18] sm:$0xff]
    %vm81 = vcmask 261120
    %v83 = vsel %vm81, %v73, 0
    %v86 = vsel %vm81, %v74, 0
    %v89 = vsel %vm81, %v75, 0
    %v92 = vsel %vm81, %v76, 0
    %94 = vmatprep.subr.mxu0 0.0
    %v95 = vand.u32 %v77, 4294901760
    %96 = vmatpush1.msra.mxu0 %v95
    %97 = vmatprep.subr.mxu0 0.0
    %v98 = vand.u32 %v78, 4294901760
    %99 = vmatpush1.msra.mxu0 %v98
    %100 = vmatprep.subr.mxu0 0.0
    %v101 = vand.u32 %v79, 4294901760
    %102 = vmatpush1.msra.mxu0 %v101
    %103 = vmatprep.subr.mxu0 0.0
    %v104 = vand.u32 %v80, 4294901760
    %105 = vmatpush1.msra.mxu0 %v104
    %106 = vmatprep.subr.mxu0 0.0
    %107 = vmatpush1.msra.mxu0 0.0
    %108 = vmatprep.subr.mxu0 0.0
    %109 = vmatpush1.msra.mxu0 0.0
    %110 = vmatprep.subr.mxu0 0.0
    %111 = vmatpush1.msra.mxu0 0.0
    %112 = vmatprep.subr.mxu0 0.0
    %113 = vmatpush1.msra.mxu0 0.0
    %114 = vmatprep.subr.mxu0 0.0
    %115 = vmatpush1.msra.mxu0 0.0
    %116 = vmatprep.subr.mxu0 0.0
    %117 = vmatpush1.msra.mxu0 0.0
    %118 = vmatprep.subr.mxu0 0.0
    %119 = vmatpush1.msra.mxu0 0.0
    %120 = vmatprep.subr.mxu0 0.0
    %121 = vmatpush1.msra.mxu0 0.0
    %122 = vmatprep.subr.mxu0 0.0
    %123 = vmatpush1.msra.mxu0 0.0
    %124 = vmatprep.subr.mxu0 0.0
    %125 = vmatpush1.msra.mxu0 0.0
    %126 = vmatprep.subr.mxu0 0.0
    %127 = vmatpush1.msra.mxu0 0.0
    %128 = vmatprep.subr.mxu0 0.0
    %129 = vmatpush1.msra.mxu0 0.0
    %130 = vmatprep.subr.mxu0 0.0
    %131 = vmatpush1.msra.mxu0 0.0
    %132 = vmatprep.subr.mxu0 0.0
    %133 = vmatpush1.msra.mxu0 0.0
    %134 = vmatprep.subr.mxu0 0.0
    %135 = vmatpush1.msra.mxu0 0.0
    %136 = vmatprep.subr.mxu0 0.0
    %137 = vmatpush1.msra.mxu0 0.0
    %138 = vmatprep.subr.mxu0 0.0
    %139 = vmatpush1.msra.mxu0 0.0
    %140 = vmatprep.subr.mxu0 0.0
    %141 = vmatpush1.msra.mxu0 0.0
    %142 = vmatprep.subr.mxu0 0.0
    %143 = vmatpush1.msra.mxu0 0.0
    %144 = vmatprep.subr.mxu0 0.0
    %145 = vmatpush1.msra.mxu0 0.0
    %146 = vmatprep.subr.mxu0 0.0
    %147 = vmatpush1.msra.mxu0 0.0
    %148 = vmatprep.subr.mxu0 0.0
    %149 = vmatpush1.msra.mxu0 0.0
    %150 = vmatprep.subr.mxu0 0.0
    %151 = vmatpush1.msra.mxu0 0.0
    %152 = vmatprep.subr.mxu0 0.0
    %153 = vmatpush1.msra.mxu0 0.0
    %154 = vmatprep.subr.mxu0 0.0
    %155 = vmatpush1.msra.mxu0 0.0
    %156 = vmatprep.subr.mxu0 0.0
    %157 = vmatpush1.msra.mxu0 0.0
    %158 = vmatprep.subr.mxu0 0.0
    %159 = vmatpush1.msra.mxu0 0.0
    %160 = vmatprep.subr.mxu0 0.0
    %161 = vmatpush1.msra.mxu0 0.0
    %162 = vmatprep.mubr.f32.mxu0 0.0
    %v163 = vand.u32 %v83, 4294901760
    %v164 = vsub.f32 %v83, %v163
    %v165 = vand.u32 %v164, 4294901760
    %v166 = vsub.f32 %v164, %v165
    %v167 = vand.u32 %v166, 4294901760
    %168 = vmatmul.mubr.f32.gmra.mrb[0].mxu0 %v167
    %v169 = vpop.f32.mrb[0].mxu0
    %v170 = vadd.f32 0.0, %v169
    %v171 = vpop.f32.mrb[0].mxu0
    %172 = vmatprep.mubr.f32.mxu0 0.0
    %v173 = vand.u32 %v86, 4294901760
    %v174 = vsub.f32 %v86, %v173
    %v175 = vand.u32 %v174, 4294901760
    %v176 = vsub.f32 %v174, %v175
    %v177 = vand.u32 %v176, 4294901760
    %178 = vmatmul.mubr.f32.gmra.mrb[0].mxu0 %v177
    %v179 = vpop.f32.mrb[0].mxu0
    %v180 = vadd.f32 0.0, %v179
    %v181 = vpop.f32.mrb[0].mxu0
    %182 = vmatprep.mubr.f32.mxu0 0.0
    %v183 = vand.u32 %v89, 4294901760
    %v184 = vsub.f32 %v89, %v183
    %v185 = vand.u32 %v184, 4294901760
    %v186 = vsub.f32 %v184, %v185
    %v187 = vand.u32 %v186, 4294901760
    %188 = vmatmul.mubr.f32.gmra.mrb[0].mxu0 %v187
    %v189 = vpop.f32.mrb[0].mxu0
    %v190 = vadd.f32 0.0, %v189
    %v191 = vpop.f32.mrb[0].mxu0
    %192 = vmatprep.mubr.f32.mxu0 0.0
    %v193 = vand.u32 %v92, 4294901760
    %v194 = vsub.f32 %v92, %v193
    %v195 = vand.u32 %v194, 4294901760
    %v196 = vsub.f32 %v194, %v195
    %v197 = vand.u32 %v196, 4294901760
    %198 = vmatmul.mubr.f32.gmra.mrb[0].mxu0 %v197
    %v199 = vpop.f32.mrb[0].mxu0
    %v200 = vadd.f32 0.0, %v199
    %v201 = vpop.f32.mrb[0].mxu0
    %202 = vdwg.mxu0
    %203 = vmatprep.subr.mxu0 0.0
    %v204 = vand.u32 %v77, 4294901760
    %v205 = vsub.f32 %v77, %v204
    %v206 = vand.u32 %v205, 4294901760
    %v207 = vsub.f32 %v205, %v206
    %v208 = vand.u32 %v207, 4294901760
    %209 = vmatpush1.msra.mxu0 %v208
    %210 = vmatprep.subr.mxu0 0.0
    %v211 = vand.u32 %v78, 4294901760
    %v212 = vsub.f32 %v78, %v211
    %v213 = vand.u32 %v212, 4294901760
    %v214 = vsub.f32 %v212, %v213
    %v215 = vand.u32 %v214, 4294901760
    %216 = vmatpush1.msra.mxu0 %v215
    %217 = vmatprep.subr.mxu0 0.0
    %v218 = vand.u32 %v79, 4294901760
    %v219 = vsub.f32 %v79, %v218
    %v220 = vand.u32 %v219, 4294901760
    %v221 = vsub.f32 %v219, %v220
    %v222 = vand.u32 %v221, 4294901760
    %223 = vmatpush1.msra.mxu0 %v222
    %224 = vmatprep.subr.mxu0 0.0
    %v225 = vand.u32 %v80, 4294901760
    %v226 = vsub.f32 %v80, %v225
    %v227 = vand.u32 %v226, 4294901760
    %v228 = vsub.f32 %v226, %v227
    %v229 = vand.u32 %v228, 4294901760
    %230 = vmatpush1.msra.mxu0 %v229
    %231 = vmatprep.subr.mxu0 0.0
    %232 = vmatpush1.msra.mxu0 0.0
    %233 = vmatprep.subr.mxu0 0.0
    %234 = vmatpush1.msra.mxu0 0.0
    %235 = vmatprep.subr.mxu0 0.0
    %236 = vmatpush1.msra.mxu0 0.0
    %237 = vmatprep.subr.mxu0 0.0
    %238 = vmatpush1.msra.mxu0 0.0
    %239 = vmatprep.subr.mxu0 0.0
    %240 = vmatpush1.msra.mxu0 0.0
    %241 = vmatprep.subr.mxu0 0.0
    %242 = vmatpush1.msra.mxu0 0.0
    %243 = vmatprep.subr.mxu0 0.0
    %244 = vmatpush1.msra.mxu0 0.0
    %245 = vmatprep.subr.mxu0 0.0
    %246 = vmatpush1.msra.mxu0 0.0
    %247 = vmatprep.subr.mxu0 0.0
    %248 = vmatpush1.msra.mxu0 0.0
    %249 = vmatprep.subr.mxu0 0.0
    %250 = vmatpush1.msra.mxu0 0.0
    %251 = vmatprep.subr.mxu0 0.0
    %252 = vmatpush1.msra.mxu0 0.0
    %253 = vmatprep.subr.mxu0 0.0
    %254 = vmatpush1.msra.mxu0 0.0
    %255 = vmatprep.subr.mxu0 0.0
    %256 = vmatpush1.msra.mxu0 0.0
    %257 = vmatprep.subr.mxu0 0.0
    %258 = vmatpush1.msra.mxu0 0.0
    %259 = vmatprep.subr.mxu0 0.0
    %260 = vmatpush1.msra.mxu0 0.0
    %261 = vmatprep.subr.mxu0 0.0
    %262 = vmatpush1.msra.mxu0 0.0
    %263 = vmatprep.subr.mxu0 0.0
    %264 = vmatpush1.msra.mxu0 0.0
    %265 = vmatprep.subr.mxu0 0.0
    %266 = vmatpush1.msra.mxu0 0.0
    %267 = vmatprep.subr.mxu0 0.0
    %268 = vmatpush1.msra.mxu0 0.0
    %269 = vmatprep.subr.mxu0 0.0
    %270 = vmatpush1.msra.mxu0 0.0
    %271 = vmatprep.subr.mxu0 0.0
    %272 = vmatpush1.msra.mxu0 0.0
    %273 = vmatprep.subr.mxu0 0.0
    %274 = vmatpush1.msra.mxu0 0.0
    %275 = vmatprep.subr.mxu0 0.0
    %276 = vmatpush1.msra.mxu0 0.0
    %277 = vmatprep.subr.mxu0 0.0
    %278 = vmatpush1.msra.mxu0 0.0
    %279 = vmatprep.subr.mxu0 0.0
    %280 = vmatpush1.msra.mxu0 0.0
    %281 = vmatprep.subr.mxu0 0.0
    %282 = vmatpush1.msra.mxu0 0.0
    %283 = vmatprep.subr.mxu0 0.0
    %284 = vmatpush1.msra.mxu0 0.0
    %285 = vmatprep.subr.mxu0 0.0
    %286 = vmatpush1.msra.mxu0 0.0
    %287 = vmatprep.mubr.f32.mxu0 0.0
    %v288 = vand.u32 %v83, 4294901760
    %289 = vmatmul.mubr.f32.gmra.mrb[0].mxu0 %v288
    %v290 = vpop.f32.mrb[0].mxu0
    %v291 = vadd.f32 %v170, %v290
    %v292 = vpop.f32.mrb[0].mxu0
    %293 = vmatprep.mubr.f32.mxu0 0.0
    %v294 = vand.u32 %v86, 4294901760
    %295 = vmatmul.mubr.f32.gmra.mrb[0].mxu0 %v294
    %v296 = vpop.f32.mrb[0].mxu0
    %v297 = vadd.f32 %v180, %v296
    %v298 = vpop.f32.mrb[0].mxu0
    %299 = vmatprep.mubr.f32.mxu0 0.0
    %v300 = vand.u32 %v89, 4294901760
    %301 = vmatmul.mubr.f32.gmra.mrb[0].mxu0 %v300
    %v302 = vpop.f32.mrb[0].mxu0
    %v303 = vadd.f32 %v190, %v302
    %v304 = vpop.f32.mrb[0].mxu0
    %305 = vmatprep.mubr.f32.mxu0 0.0
    %v306 = vand.u32 %v92, 4294901760
    %307 = vmatmul.mubr.f32.gmra.mrb[0].mxu0 %v306
    %v308 = vpop.f32.mrb[0].mxu0
    %v309 = vadd.f32 %v200, %v308
    %v310 = vpop.f32.mrb[0].mxu0
    %311 = vdwg.mxu0
    %312 = vmatprep.subr.mxu0 0.0
    %v313 = vand.u32 %v77, 4294901760
    %v314 = vsub.f32 %v77, %v313
    %315 = vmatpush1.msra.mxu0 %v314
    %316 = vmatprep.subr.mxu0 0.0
    %v317 = vand.u32 %v78, 4294901760
    %v318 = vsub.f32 %v78, %v317
    %319 = vmatpush1.msra.mxu0 %v318
    %320 = vmatprep.subr.mxu0 0.0
    %v321 = vand.u32 %v79, 4294901760
    %v322 = vsub.f32 %v79, %v321
    %323 = vmatpush1.msra.mxu0 %v322
    %324 = vmatprep.subr.mxu0 0.0
    %v325 = vand.u32 %v80, 4294901760
    %v326 = vsub.f32 %v80, %v325
    %327 = vmatpush1.msra.mxu0 %v326
    %328 = vmatprep.subr.mxu0 0.0
    %329 = vmatpush1.msra.mxu0 0.0
    %330 = vmatprep.subr.mxu0 0.0
    %331 = vmatpush1.msra.mxu0 0.0
    %332 = vmatprep.subr.mxu0 0.0
    %333 = vmatpush1.msra.mxu0 0.0
    %334 = vmatprep.subr.mxu0 0.0
    %335 = vmatpush1.msra.mxu0 0.0
    %336 = vmatprep.subr.mxu0 0.0
    %337 = vmatpush1.msra.mxu0 0.0
    %338 = vmatprep.subr.mxu0 0.0
    %339 = vmatpush1.msra.mxu0 0.0
    %340 = vmatprep.subr.mxu0 0.0
    %341 = vmatpush1.msra.mxu0 0.0
    %342 = vmatprep.subr.mxu0 0.0
    %343 = vmatpush1.msra.mxu0 0.0
    %344 = vmatprep.subr.mxu0 0.0
    %345 = vmatpush1.msra.mxu0 0.0
    %346 = vmatprep.subr.mxu0 0.0
    %347 = vmatpush1.msra.mxu0 0.0
    %348 = vmatprep.subr.mxu0 0.0
    %349 = vmatpush1.msra.mxu0 0.0
    %350 = vmatprep.subr.mxu0 0.0
    %351 = vmatpush1.msra.mxu0 0.0
    %352 = vmatprep.subr.mxu0 0.0
    %353 = vmatpush1.msra.mxu0 0.0
    %354 = vmatprep.subr.mxu0 0.0
    %355 = vmatpush1.msra.mxu0 0.0
    %356 = vmatprep.subr.mxu0 0.0
    %357 = vmatpush1.msra.mxu0 0.0
    %358 = vmatprep.subr.mxu0 0.0
    %359 = vmatpush1.msra.mxu0 0.0
    %360 = vmatprep.subr.mxu0 0.0
    %361 = vmatpush1.msra.mxu0 0.0
    %362 = vmatprep.subr.mxu0 0.0
    %363 = vmatpush1.msra.mxu0 0.0
    %364 = vmatprep.subr.mxu0 0.0
    %365 = vmatpush1.msra.mxu0 0.0
    %366 = vmatprep.subr.mxu0 0.0
    %367 = vmatpush1.msra.mxu0 0.0
    %368 = vmatprep.subr.mxu0 0.0
    %369 = vmatpush1.msra.mxu0 0.0
    %370 = vmatprep.subr.mxu0 0.0
    %371 = vmatpush1.msra.mxu0 0.0
    %372 = vmatprep.subr.mxu0 0.0
    %373 = vmatpush1.msra.mxu0 0.0
    %374 = vmatprep.subr.mxu0 0.0
    %375 = vmatpush1.msra.mxu0 0.0
    %376 = vmatprep.subr.mxu0 0.0
    %377 = vmatpush1.msra.mxu0 0.0
    %378 = vmatprep.subr.mxu0 0.0
    %379 = vmatpush1.msra.mxu0 0.0
    %380 = vmatprep.subr.mxu0 0.0
    %381 = vmatpush1.msra.mxu0 0.0
    %382 = vmatprep.subr.mxu0 0.0
    %383 = vmatpush1.msra.mxu0 0.0
    %384 = vmatprep.mubr.f32.mxu0 0.0
    %v385 = vand.u32 %v83, 4294901760
    %v386 = vsub.f32 %v83, %v385
    %387 = vmatmul.mubr.f32.gmra.mrb[0].mxu0 %v386
    %v388 = vpop.f32.mrb[0].mxu0
    %v389 = vadd.f32 %v291, %v388
    %v390 = vpop.f32.mrb[0].mxu0
    %391 = vmatprep.mubr.f32.mxu0 0.0
    %v392 = vand.u32 %v86, 4294901760
    %v393 = vsub.f32 %v86, %v392
    %394 = vmatmul.mubr.f32.gmra.mrb[0].mxu0 %v393
    %v395 = vpop.f32.mrb[0].mxu0
    %v396 = vadd.f32 %v297, %v395
    %v397 = vpop.f32.mrb[0].mxu0
    %398 = vmatprep.mubr.f32.mxu0 0.0
    %v399 = vand.u32 %v89, 4294901760
    %v400 = vsub.f32 %v89, %v399
    %401 = vmatmul.mubr.f32.gmra.mrb[0].mxu0 %v400
    %v402 = vpop.f32.mrb[0].mxu0
    %v403 = vadd.f32 %v303, %v402
    %v404 = vpop.f32.mrb[0].mxu0
    %405 = vmatprep.mubr.f32.mxu0 0.0
    %v406 = vand.u32 %v92, 4294901760
    %v407 = vsub.f32 %v92, %v406
    %408 = vmatmul.mubr.f32.gmra.mrb[0].mxu0 %v407
    %v409 = vpop.f32.mrb[0].mxu0
    %v410 = vadd.f32 %v309, %v409
    %v411 = vpop.f32.mrb[0].mxu0
    %412 = vdwg.mxu0
    %413 = vmatprep.subr.mxu0 0.0
    %v414 = vand.u32 %v77, 4294901760
    %415 = vmatpush1.msra.mxu0 %v414
    %416 = vmatprep.subr.mxu0 0.0
    %v417 = vand.u32 %v78, 4294901760
    %418 = vmatpush1.msra.mxu0 %v417
    %419 = vmatprep.subr.mxu0 0.0
    %v420 = vand.u32 %v79, 4294901760
    %421 = vmatpush1.msra.mxu0 %v420
    %422 = vmatprep.subr.mxu0 0.0
    %v423 = vand.u32 %v80, 4294901760
    %424 = vmatpush1.msra.mxu0 %v423
    %425 = vmatprep.subr.mxu0 0.0
    %426 = vmatpush1.msra.mxu0 0.0
    %427 = vmatprep.subr.mxu0 0.0
    %428 = vmatpush1.msra.mxu0 0.0
    %429 = vmatprep.subr.mxu0 0.0
    %430 = vmatpush1.msra.mxu0 0.0
    %431 = vmatprep.subr.mxu0 0.0
    %432 = vmatpush1.msra.mxu0 0.0
    %433 = vmatprep.subr.mxu0 0.0
    %434 = vmatpush1.msra.mxu0 0.0
    %435 = vmatprep.subr.mxu0 0.0
    %436 = vmatpush1.msra.mxu0 0.0
    %437 = vmatprep.subr.mxu0 0.0
    %438 = vmatpush1.msra.mxu0 0.0
    %439 = vmatprep.subr.mxu0 0.0
    %440 = vmatpush1.msra.mxu0 0.0
    %441 = vmatprep.subr.mxu0 0.0
    %442 = vmatpush1.msra.mxu0 0.0
    %443 = vmatprep.subr.mxu0 0.0
    %444 = vmatpush1.msra.mxu0 0.0
    %445 = vmatprep.subr.mxu0 0.0
    %446 = vmatpush1.msra.mxu0 0.0
    %447 = vmatprep.subr.mxu0 0.0
    %448 = vmatpush1.msra.mxu0 0.0
    %449 = vmatprep.subr.mxu0 0.0
    %450 = vmatpush1.msra.mxu0 0.0
    %451 = vmatprep.subr.mxu0 0.0
    %452 = vmatpush1.msra.mxu0 0.0
    %453 = vmatprep.subr.mxu0 0.0
    %454 = vmatpush1.msra.mxu0 0.0
    %455 = vmatprep.subr.mxu0 0.0
    %456 = vmatpush1.msra.mxu0 0.0
    %457 = vmatprep.subr.mxu0 0.0
    %458 = vmatpush1.msra.mxu0 0.0
    %459 = vmatprep.subr.mxu0 0.0
    %460 = vmatpush1.msra.mxu0 0.0
    %461 = vmatprep.subr.mxu0 0.0
    %462 = vmatpush1.msra.mxu0 0.0
    %463 = vmatprep.subr.mxu0 0.0
    %464 = vmatpush1.msra.mxu0 0.0
    %465 = vmatprep.subr.mxu0 0.0
    %466 = vmatpush1.msra.mxu0 0.0
    %467 = vmatprep.subr.mxu0 0.0
    %468 = vmatpush1.msra.mxu0 0.0
    %469 = vmatprep.subr.mxu0 0.0
    %470 = vmatpush1.msra.mxu0 0.0
    %471 = vmatprep.subr.mxu0 0.0
    %472 = vmatpush1.msra.mxu0 0.0
    %473 = vmatprep.subr.mxu0 0.0
    %474 = vmatpush1.msra.mxu0 0.0
    %475 = vmatprep.subr.mxu0 0.0
    %476 = vmatpush1.msra.mxu0 0.0
    %477 = vmatprep.subr.mxu0 0.0
    %478 = vmatpush1.msra.mxu0 0.0
    %479 = vmatprep.subr.mxu0 0.0
    %480 = vmatpush1.msra.mxu0 0.0
    %481 = vmatprep.mubr.f32.mxu0 0.0
    %v482 = vand.u32 %v83, 4294901760
    %v483 = vsub.f32 %v83, %v482
    %v484 = vand.u32 %v483, 4294901760
    %485 = vmatmul.mubr.f32.gmra.mrb[0].mxu0 %v484
    %v486 = vpop.f32.mrb[0].mxu0
    %v487 = vadd.f32 %v389, %v486
    %v488 = vpop.f32.mrb[0].mxu0
    %489 = vmatprep.mubr.f32.mxu0 0.0
    %v490 = vand.u32 %v86, 4294901760
    %v491 = vsub.f32 %v86, %v490
    %v492 = vand.u32 %v491, 4294901760
    %493 = vmatmul.mubr.f32.gmra.mrb[0].mxu0 %v492
    %v494 = vpop.f32.mrb[0].mxu0
    %v495 = vadd.f32 %v396, %v494
    %v496 = vpop.f32.mrb[0].mxu0
    %497 = vmatprep.mubr.f32.mxu0 0.0
    %v498 = vand.u32 %v89, 4294901760
    %v499 = vsub.f32 %v89, %v498
    %v500 = vand.u32 %v499, 4294901760
    %501 = vmatmul.mubr.f32.gmra.mrb[0].mxu0 %v500
    %v502 = vpop.f32.mrb[0].mxu0
    %v503 = vadd.f32 %v403, %v502
    %v504 = vpop.f32.mrb[0].mxu0
    %505 = vmatprep.mubr.f32.mxu0 0.0
    %v506 = vand.u32 %v92, 4294901760
    %v507 = vsub.f32 %v92, %v506
    %v508 = vand.u32 %v507, 4294901760
    %509 = vmatmul.mubr.f32.gmra.mrb[0].mxu0 %v508
    %v510 = vpop.f32.mrb[0].mxu0
    %v511 = vadd.f32 %v410, %v510
    %v512 = vpop.f32.mrb[0].mxu0
    %513 = vdwg.mxu0
    %514 = vmatprep.subr.mxu0 0.0
    %v515 = vand.u32 %v77, 4294901760
    %v516 = vsub.f32 %v77, %v515
    %v517 = vand.u32 %v516, 4294901760
    %518 = vmatpush1.msra.mxu0 %v517
    %519 = vmatprep.subr.mxu0 0.0
    %v520 = vand.u32 %v78, 4294901760
    %v521 = vsub.f32 %v78, %v520
    %v522 = vand.u32 %v521, 4294901760
    %523 = vmatpush1.msra.mxu0 %v522
    %524 = vmatprep.subr.mxu0 0.0
    %v525 = vand.u32 %v79, 4294901760
    %v526 = vsub.f32 %v79, %v525
    %v527 = vand.u32 %v526, 4294901760
    %528 = vmatpush1.msra.mxu0 %v527
    %529 = vmatprep.subr.mxu0 0.0
    %v530 = vand.u32 %v80, 4294901760
    %v531 = vsub.f32 %v80, %v530
    %v532 = vand.u32 %v531, 4294901760
    %533 = vmatpush1.msra.mxu0 %v532
    %534 = vmatprep.subr.mxu0 0.0
    %535 = vmatpush1.msra.mxu0 0.0
    %536 = vmatprep.subr.mxu0 0.0
    %537 = vmatpush1.msra.mxu0 0.0
    %538 = vmatprep.subr.mxu0 0.0
    %539 = vmatpush1.msra.mxu0 0.0
    %540 = vmatprep.subr.mxu0 0.0
    %541 = vmatpush1.msra.mxu0 0.0
    %542 = vmatprep.subr.mxu0 0.0
    %543 = vmatpush1.msra.mxu0 0.0
    %544 = vmatprep.subr.mxu0 0.0
    %545 = vmatpush1.msra.mxu0 0.0
    %546 = vmatprep.subr.mxu0 0.0
    %547 = vmatpush1.msra.mxu0 0.0
    %548 = vmatprep.subr.mxu0 0.0
    %549 = vmatpush1.msra.mxu0 0.0
    %550 = vmatprep.subr.mxu0 0.0
    %551 = vmatpush1.msra.mxu0 0.0
    %552 = vmatprep.subr.mxu0 0.0
    %553 = vmatpush1.msra.mxu0 0.0
    %554 = vmatprep.subr.mxu0 0.0
    %555 = vmatpush1.msra.mxu0 0.0
    %556 = vmatprep.subr.mxu0 0.0
    %557 = vmatpush1.msra.mxu0 0.0
    %558 = vmatprep.subr.mxu0 0.0
    %559 = vmatpush1.msra.mxu0 0.0
    %560 = vmatprep.subr.mxu0 0.0
    %561 = vmatpush1.msra.mxu0 0.0
    %562 = vmatprep.subr.mxu0 0.0
    %563 = vmatpush1.msra.mxu0 0.0
    %564 = vmatprep.subr.mxu0 0.0
    %565 = vmatpush1.msra.mxu0 0.0
    %566 = vmatprep.subr.mxu0 0.0
    %567 = vmatpush1.msra.mxu0 0.0
    %568 = vmatprep.subr.mxu0 0.0
    %569 = vmatpush1.msra.mxu0 0.0
    %570 = vmatprep.subr.mxu0 0.0
    %571 = vmatpush1.msra.mxu0 0.0
    %572 = vmatprep.subr.mxu0 0.0
    %573 = vmatpush1.msra.mxu0 0.0
    %574 = vmatprep.subr.mxu0 0.0
    %575 = vmatpush1.msra.mxu0 0.0
    %576 = vmatprep.subr.mxu0 0.0
    %577 = vmatpush1.msra.mxu0 0.0
    %578 = vmatprep.subr.mxu0 0.0
    %579 = vmatpush1.msra.mxu0 0.0
    %580 = vmatprep.subr.mxu0 0.0
    %581 = vmatpush1.msra.mxu0 0.0
    %582 = vmatprep.subr.mxu0 0.0
    %583 = vmatpush1.msra.mxu0 0.0
    %584 = vmatprep.subr.mxu0 0.0
    %585 = vmatpush1.msra.mxu0 0.0
    %586 = vmatprep.subr.mxu0 0.0
    %587 = vmatpush1.msra.mxu0 0.0
    %588 = vmatprep.subr.mxu0 0.0
    %589 = vmatpush1.msra.mxu0 0.0
    %590 = vmatprep.mubr.f32.mxu0 0.0
    %v591 = vand.u32 %v83, 4294901760
    %592 = vmatmul.mubr.f32.gmra.mrb[0].mxu0 %v591
    %v593 = vpop.f32.mrb[0].mxu0
    %v594 = vadd.f32 %v487, %v593
    %v595 = vpop.f32.mrb[0].mxu0
    %596 = vmatprep.mubr.f32.mxu0 0.0
    %v597 = vand.u32 %v86, 4294901760
    %598 = vmatmul.mubr.f32.gmra.mrb[0].mxu0 %v597
    %v599 = vpop.f32.mrb[0].mxu0
    %v600 = vadd.f32 %v495, %v599
    %v601 = vpop.f32.mrb[0].mxu0
    %602 = vmatprep.mubr.f32.mxu0 0.0
    %v603 = vand.u32 %v89, 4294901760
    %604 = vmatmul.mubr.f32.gmra.mrb[0].mxu0 %v603
    %v605 = vpop.f32.mrb[0].mxu0
    %v606 = vadd.f32 %v503, %v605
    %v607 = vpop.f32.mrb[0].mxu0
    %608 = vmatprep.mubr.f32.mxu0 0.0
    %v609 = vand.u32 %v92, 4294901760
    %610 = vmatmul.mubr.f32.gmra.mrb[0].mxu0 %v609
    %v611 = vpop.f32.mrb[0].mxu0
    %v612 = vadd.f32 %v511, %v611
    %v613 = vpop.f32.mrb[0].mxu0
    %614 = vdwg.mxu0
    %615 = vmatprep.subr.mxu0 0.0
    %v616 = vand.u32 %v77, 4294901760
    %617 = vmatpush1.msra.mxu0 %v616
    %618 = vmatprep.subr.mxu0 0.0
    %v619 = vand.u32 %v78, 4294901760
    %620 = vmatpush1.msra.mxu0 %v619
    %621 = vmatprep.subr.mxu0 0.0
    %v622 = vand.u32 %v79, 4294901760
    %623 = vmatpush1.msra.mxu0 %v622
    %624 = vmatprep.subr.mxu0 0.0
    %v625 = vand.u32 %v80, 4294901760
    %626 = vmatpush1.msra.mxu0 %v625
    %627 = vmatprep.subr.mxu0 0.0
    %628 = vmatpush1.msra.mxu0 0.0
    %629 = vmatprep.subr.mxu0 0.0
    %630 = vmatpush1.msra.mxu0 0.0
    %631 = vmatprep.subr.mxu0 0.0
    %632 = vmatpush1.msra.mxu0 0.0
    %633 = vmatprep.subr.mxu0 0.0
    %634 = vmatpush1.msra.mxu0 0.0
    %635 = vmatprep.subr.mxu0 0.0
    %636 = vmatpush1.msra.mxu0 0.0
    %637 = vmatprep.subr.mxu0 0.0
    %638 = vmatpush1.msra.mxu0 0.0
    %639 = vmatprep.subr.mxu0 0.0
    %640 = vmatpush1.msra.mxu0 0.0
    %641 = vmatprep.subr.mxu0 0.0
    %642 = vmatpush1.msra.mxu0 0.0
    %643 = vmatprep.subr.mxu0 0.0
    %644 = vmatpush1.msra.mxu0 0.0
    %645 = vmatprep.subr.mxu0 0.0
    %646 = vmatpush1.msra.mxu0 0.0
    %647 = vmatprep.subr.mxu0 0.0
    %648 = vmatpush1.msra.mxu0 0.0
    %649 = vmatprep.subr.mxu0 0.0
    %650 = vmatpush1.msra.mxu0 0.0
    %651 = vmatprep.subr.mxu0 0.0
    %652 = vmatpush1.msra.mxu0 0.0
    %653 = vmatprep.subr.mxu0 0.0
    %654 = vmatpush1.msra.mxu0 0.0
    %655 = vmatprep.subr.mxu0 0.0
    %656 = vmatpush1.msra.mxu0 0.0
    %657 = vmatprep.subr.mxu0 0.0
    %658 = vmatpush1.msra.mxu0 0.0
    %659 = vmatprep.subr.mxu0 0.0
    %660 = vmatpush1.msra.mxu0 0.0
    %661 = vmatprep.subr.mxu0 0.0
    %662 = vmatpush1.msra.mxu0 0.0
    %663 = vmatprep.subr.mxu0 0.0
    %664 = vmatpush1.msra.mxu0 0.0
    %665 = vmatprep.subr.mxu0 0.0
    %666 = vmatpush1.msra.mxu0 0.0
    %667 = vmatprep.subr.mxu0 0.0
    %668 = vmatpush1.msra.mxu0 0.0
    %669 = vmatprep.subr.mxu0 0.0
    %670 = vmatpush1.msra.mxu0 0.0
    %671 = vmatprep.subr.mxu0 0.0
    %672 = vmatpush1.msra.mxu0 0.0
    %673 = vmatprep.subr.mxu0 0.0
    %674 = vmatpush1.msra.mxu0 0.0
    %675 = vmatprep.subr.mxu0 0.0
    %676 = vmatpush1.msra.mxu0 0.0
    %677 = vmatprep.subr.mxu0 0.0
    %678 = vmatpush1.msra.mxu0 0.0
    %679 = vmatprep.subr.mxu0 0.0
    %680 = vmatpush1.msra.mxu0 0.0
    %681 = vmatprep.subr.mxu0 0.0
    %682 = vmatpush1.msra.mxu0 0.0
    %683 = vmatprep.mubr.f32.mxu0 0.0
    %v684 = vand.u32 %v83, 4294901760
    %685 = vmatmul.mubr.f32.gmra.mrb[0].mxu0 %v684
    %v686 = vpop.f32.mrb[0].mxu0
    %v687 = vadd.f32 %v594, %v686
    %v688 = vpop.f32.mrb[0].mxu0
    %689 = vmatprep.mubr.f32.mxu0 0.0
    %v690 = vand.u32 %v86, 4294901760
    %691 = vmatmul.mubr.f32.gmra.mrb[0].mxu0 %v690
    %v692 = vpop.f32.mrb[0].mxu0
    %v693 = vadd.f32 %v600, %v692
    %v694 = vpop.f32.mrb[0].mxu0
    %695 = vmatprep.mubr.f32.mxu0 0.0
    %v696 = vand.u32 %v89, 4294901760
    %697 = vmatmul.mubr.f32.gmra.mrb[0].mxu0 %v696
    %v698 = vpop.f32.mrb[0].mxu0
    %v699 = vadd.f32 %v606, %v698
    %v700 = vpop.f32.mrb[0].mxu0
    %701 = vmatprep.mubr.f32.mxu0 0.0
    %v702 = vand.u32 %v92, 4294901760
    %703 = vmatmul.mubr.f32.gmra.mrb[0].mxu0 %v702
    %v704 = vpop.f32.mrb[0].mxu0
    %v705 = vadd.f32 %v612, %v704
    %v706 = vpop.f32.mrb[0].mxu0
    %707 = vdwg.mxu0
    %v708 = vld [vmem:[#allocation8] sm:$0xff]
    %v709 = vld [vmem:[#allocation8 + $0x8] sm:$0xff]
    %v710 = vld [vmem:[#allocation8 + $0x10] sm:$0xff]
    %v711 = vld [vmem:[#allocation8 + $0x18] sm:$0xff]
    %716 = vrot.lane.b32.xlu0 %v687, 96
    %v717 = vpop.permute.xlu0 %716
    %718 = vrot.lane.b32.xlu0 %v693, 96
    %v719 = vpop.permute.xlu0 %718
    %720 = vrot.lane.b32.xlu0 %v699, 96
    %v721 = vpop.permute.xlu0 %720
    %722 = vrot.lane.b32.xlu0 %v705, 96
    %v723 = vpop.permute.xlu0 %722
    %v724 = vsel %vm81, %v687, 0
    %v726 = vsel %vm81, %v693, 0
    %v728 = vsel %vm81, %v699, 0
    %v730 = vsel %vm81, %v705, 0
    %v732 = vsel %vm81, %v717, 0
    %v734 = vsel %vm81, %v719, 0
    %v736 = vsel %vm81, %v721, 0
    %v738 = vsel %vm81, %v723, 0
    %740 = vmatprep.subr.mxu0 0.0
    %v741 = vand.u32 %v732, 4294901760
    %742 = vmatpush1.xpose.msra.mxu0 %v741
    %743 = vmatprep.subr.mxu0 0.0
    %v744 = vand.u32 %v734, 4294901760
    %745 = vmatpush1.xpose.msra.mxu0 %v744
    %746 = vmatprep.subr.mxu0 0.0
    %v747 = vand.u32 %v736, 4294901760
    %748 = vmatpush1.xpose.msra.mxu0 %v747
    %749 = vmatprep.subr.mxu0 0.0
    %v750 = vand.u32 %v738, 4294901760
    %751 = vmatpush1.xpose.msra.mxu0 %v750
    %752 = vmatprep.subr.mxu0 0.0
    %753 = vmatpush1.xpose.msra.mxu0 0.0
    %754 = vmatprep.subr.mxu0 0.0
    %755 = vmatpush1.xpose.msra.mxu0 0.0
    %756 = vmatprep.subr.mxu0 0.0
    %757 = vmatpush1.xpose.msra.mxu0 0.0
    %758 = vmatprep.subr.mxu0 0.0
    %759 = vmatpush1.xpose.msra.mxu0 0.0
    %760 = vmatprep.subr.mxu0 0.0
    %761 = vmatpush1.xpose.msra.mxu0 0.0
    %762 = vmatprep.subr.mxu0 0.0
    %763 = vmatpush1.xpose.msra.mxu0 0.0
    %764 = vmatprep.subr.mxu0 0.0
    %765 = vmatpush1.xpose.msra.mxu0 0.0
    %766 = vmatprep.subr.mxu0 0.0
    %767 = vmatpush1.xpose.msra.mxu0 0.0
    %768 = vmatprep.subr.mxu0 0.0
    %769 = vmatpush1.xpose.msra.mxu0 0.0
    %770 = vmatprep.subr.mxu0 0.0
    %771 = vmatpush1.xpose.msra.mxu0 0.0
    %772 = vmatprep.subr.mxu0 0.0
    %773 = vmatpush1.xpose.msra.mxu0 0.0
    %774 = vmatprep.subr.mxu0 0.0
    %775 = vmatpush1.xpose.msra.mxu0 0.0
    %776 = vmatprep.subr.mxu0 0.0
    %777 = vmatpush1.xpose.msra.mxu0 0.0
    %778 = vmatprep.subr.mxu0 0.0
    %779 = vmatpush1.xpose.msra.mxu0 0.0
    %780 = vmatprep.subr.mxu0 0.0
    %781 = vmatpush1.xpose.msra.mxu0 0.0
    %782 = vmatprep.subr.mxu0 0.0
    %783 = vmatpush1.xpose.msra.mxu0 0.0
    %784 = vmatprep.subr.mxu0 0.0
    %785 = vmatpush1.xpose.msra.mxu0 0.0
    %786 = vmatprep.subr.mxu0 0.0
    %787 = vmatpush1.xpose.msra.mxu0 0.0
    %788 = vmatprep.subr.mxu0 0.0
    %789 = vmatpush1.xpose.msra.mxu0 0.0
    %790 = vmatprep.subr.mxu0 0.0
    %791 = vmatpush1.xpose.msra.mxu0 0.0
    %792 = vmatprep.subr.mxu0 0.0
    %793 = vmatpush1.xpose.msra.mxu0 0.0
    %794 = vmatprep.subr.mxu0 0.0
    %795 = vmatpush1.xpose.msra.mxu0 0.0
    %796 = vmatprep.subr.mxu0 0.0
    %797 = vmatpush1.xpose.msra.mxu0 0.0
    %798 = vmatprep.subr.mxu0 0.0
    %799 = vmatpush1.xpose.msra.mxu0 0.0
    %800 = vmatprep.subr.mxu0 0.0
    %801 = vmatpush1.xpose.msra.mxu0 0.0
    %802 = vmatprep.subr.mxu0 0.0
    %803 = vmatpush1.xpose.msra.mxu0 0.0
    %804 = vmatprep.subr.mxu0 0.0
    %805 = vmatpush1.xpose.msra.mxu0 0.0
    %806 = vmatprep.subr.mxu0 0.0
    %807 = vmatpush1.xpose.msra.mxu0 0.0
    %808 = vmatprep.mubr.f32.mxu0 0.0
    %v809 = vand.u32 %v724, 4294901760
    %v810 = vsub.f32 %v724, %v809
    %v811 = vand.u32 %v810, 4294901760
    %v812 = vsub.f32 %v810, %v811
    %v813 = vand.u32 %v812, 4294901760
    %814 = vmatmul.mubr.f32.gmra.mrb[0].mxu0 %v813
    %v815 = vpop.f32.mrb[0].mxu0
    %v816 = vadd.f32 %v708, %v815
    %v817 = vpop.f32.mrb[0].mxu0
    %818 = vmatprep.mubr.f32.mxu0 0.0
    %v819 = vand.u32 %v726, 4294901760
    %v820 = vsub.f32 %v726, %v819
    %v821 = vand.u32 %v820, 4294901760
    %v822 = vsub.f32 %v820, %v821
    %v823 = vand.u32 %v822, 4294901760
    %824 = vmatmul.mubr.f32.gmra.mrb[0].mxu0 %v823
    %v825 = vpop.f32.mrb[0].mxu0
    %v826 = vadd.f32 %v709, %v825
    %v827 = vpop.f32.mrb[0].mxu0
    %828 = vmatprep.mubr.f32.mxu0 0.0
    %v829 = vand.u32 %v728, 4294901760
    %v830 = vsub.f32 %v728, %v829
    %v831 = vand.u32 %v830, 4294901760
    %v832 = vsub.f32 %v830, %v831
    %v833 = vand.u32 %v832, 4294901760
    %834 = vmatmul.mubr.f32.gmra.mrb[0].mxu0 %v833
    %v835 = vpop.f32.mrb[0].mxu0
    %v836 = vadd.f32 %v710, %v835
    %v837 = vpop.f32.mrb[0].mxu0
    %838 = vmatprep.mubr.f32.mxu0 0.0
    %v839 = vand.u32 %v730, 4294901760
    %v840 = vsub.f32 %v730, %v839
    %v841 = vand.u32 %v840, 4294901760
    %v842 = vsub.f32 %v840, %v841
    %v843 = vand.u32 %v842, 4294901760
    %844 = vmatmul.mubr.f32.gmra.mrb[0].mxu0 %v843
    %v845 = vpop.f32.mrb[0].mxu0
    %v846 = vadd.f32 %v711, %v845
    %v847 = vpop.f32.mrb[0].mxu0
    %848 = vdwg.mxu0
    %849 = vmatprep.subr.mxu0 0.0
    %v850 = vand.u32 %v732, 4294901760
    %v851 = vsub.f32 %v732, %v850
    %v852 = vand.u32 %v851, 4294901760
    %v853 = vsub.f32 %v851, %v852
    %v854 = vand.u32 %v853, 4294901760
    %855 = vmatpush1.xpose.msra.mxu0 %v854
    %856 = vmatprep.subr.mxu0 0.0
    %v857 = vand.u32 %v734, 4294901760
    %v858 = vsub.f32 %v734, %v857
    %v859 = vand.u32 %v858, 4294901760
    %v860 = vsub.f32 %v858, %v859
    %v861 = vand.u32 %v860, 4294901760
    %862 = vmatpush1.xpose.msra.mxu0 %v861
    %863 = vmatprep.subr.mxu0 0.0
    %v864 = vand.u32 %v736, 4294901760
    %v865 = vsub.f32 %v736, %v864
    %v866 = vand.u32 %v865, 4294901760
    %v867 = vsub.f32 %v865, %v866
    %v868 = vand.u32 %v867, 4294901760
    %869 = vmatpush1.xpose.msra.mxu0 %v868
    %870 = vmatprep.subr.mxu0 0.0
    %v871 = vand.u32 %v738, 4294901760
    %v872 = vsub.f32 %v738, %v871
    %v873 = vand.u32 %v872, 4294901760
    %v874 = vsub.f32 %v872, %v873
    %v875 = vand.u32 %v874, 4294901760
    %876 = vmatpush1.xpose.msra.mxu0 %v875
    %877 = vmatprep.subr.mxu0 0.0
    %878 = vmatpush1.xpose.msra.mxu0 0.0
    %879 = vmatprep.subr.mxu0 0.0
    %880 = vmatpush1.xpose.msra.mxu0 0.0
    %881 = vmatprep.subr.mxu0 0.0
    %882 = vmatpush1.xpose.msra.mxu0 0.0
    %883 = vmatprep.subr.mxu0 0.0
    %884 = vmatpush1.xpose.msra.mxu0 0.0
    %885 = vmatprep.subr.mxu0 0.0
    %886 = vmatpush1.xpose.msra.mxu0 0.0
    %887 = vmatprep.subr.mxu0 0.0
    %888 = vmatpush1.xpose.msra.mxu0 0.0
    %889 = vmatprep.subr.mxu0 0.0
    %890 = vmatpush1.xpose.msra.mxu0 0.0
    %891 = vmatprep.subr.mxu0 0.0
    %892 = vmatpush1.xpose.msra.mxu0 0.0
    %893 = vmatprep.subr.mxu0 0.0
    %894 = vmatpush1.xpose.msra.mxu0 0.0
    %895 = vmatprep.subr.mxu0 0.0
    %896 = vmatpush1.xpose.msra.mxu0 0.0
    %897 = vmatprep.subr.mxu0 0.0
    %898 = vmatpush1.xpose.msra.mxu0 0.0
    %899 = vmatprep.subr.mxu0 0.0
    %900 = vmatpush1.xpose.msra.mxu0 0.0
    %901 = vmatprep.subr.mxu0 0.0
    %902 = vmatpush1.xpose.msra.mxu0 0.0
    %903 = vmatprep.subr.mxu0 0.0
    %904 = vmatpush1.xpose.msra.mxu0 0.0
    %905 = vmatprep.subr.mxu0 0.0
    %906 = vmatpush1.xpose.msra.mxu0 0.0
    %907 = vmatprep.subr.mxu0 0.0
    %908 = vmatpush1.xpose.msra.mxu0 0.0
    %909 = vmatprep.subr.mxu0 0.0
    %910 = vmatpush1.xpose.msra.mxu0 0.0
    %911 = vmatprep.subr.mxu0 0.0
    %912 = vmatpush1.xpose.msra.mxu0 0.0
    %913 = vmatprep.subr.mxu0 0.0
    %914 = vmatpush1.xpose.msra.mxu0 0.0
    %915 = vmatprep.subr.mxu0 0.0
    %916 = vmatpush1.xpose.msra.mxu0 0.0
    %917 = vmatprep.subr.mxu0 0.0
    %918 = vmatpush1.xpose.msra.mxu0 0.0
    %919 = vmatprep.subr.mxu0 0.0
    %920 = vmatpush1.xpose.msra.mxu0 0.0
    %921 = vmatprep.subr.mxu0 0.0
    %922 = vmatpush1.xpose.msra.mxu0 0.0
    %923 = vmatprep.subr.mxu0 0.0
    %924 = vmatpush1.xpose.msra.mxu0 0.0
    %925 = vmatprep.subr.mxu0 0.0
    %926 = vmatpush1.xpose.msra.mxu0 0.0
    %927 = vmatprep.subr.mxu0 0.0
    %928 = vmatpush1.xpose.msra.mxu0 0.0
    %929 = vmatprep.subr.mxu0 0.0
    %930 = vmatpush1.xpose.msra.mxu0 0.0
    %931 = vmatprep.subr.mxu0 0.0
    %932 = vmatpush1.xpose.msra.mxu0 0.0
    %933 = vmatprep.mubr.f32.mxu0 0.0
    %v934 = vand.u32 %v724, 4294901760
    %935 = vmatmul.mubr.f32.gmra.mrb[0].mxu0 %v934
    %v936 = vpop.f32.mrb[0].mxu0
    %v937 = vadd.f32 %v816, %v936
    %v938 = vpop.f32.mrb[0].mxu0
    %939 = vmatprep.mubr.f32.mxu0 0.0
    %v940 = vand.u32 %v726, 4294901760
    %941 = vmatmul.mubr.f32.gmra.mrb[0].mxu0 %v940
    %v942 = vpop.f32.mrb[0].mxu0
    %v943 = vadd.f32 %v826, %v942
    %v944 = vpop.f32.mrb[0].mxu0
    %945 = vmatprep.mubr.f32.mxu0 0.0
    %v946 = vand.u32 %v728, 4294901760
    %947 = vmatmul.mubr.f32.gmra.mrb[0].mxu0 %v946
    %v948 = vpop.f32.mrb[0].mxu0
    %v949 = vadd.f32 %v836, %v948
    %v950 = vpop.f32.mrb[0].mxu0
    %951 = vmatprep.mubr.f32.mxu0 0.0
    %v952 = vand.u32 %v730, 4294901760
    %953 = vmatmul.mubr.f32.gmra.mrb[0].mxu0 %v952
    %v954 = vpop.f32.mrb[0].mxu0
    %v955 = vadd.f32 %v846, %v954
    %v956 = vpop.f32.mrb[0].mxu0
    %957 = vdwg.mxu0
    %958 = vmatprep.subr.mxu0 0.0
    %v959 = vand.u32 %v732, 4294901760
    %v960 = vsub.f32 %v732, %v959
    %961 = vmatpush1.xpose.msra.mxu0 %v960
    %962 = vmatprep.subr.mxu0 0.0
    %v963 = vand.u32 %v734, 4294901760
    %v964 = vsub.f32 %v734, %v963
    %965 = vmatpush1.xpose.msra.mxu0 %v964
    %966 = vmatprep.subr.mxu0 0.0
    %v967 = vand.u32 %v736, 4294901760
    %v968 = vsub.f32 %v736, %v967
    %969 = vmatpush1.xpose.msra.mxu0 %v968
    %970 = vmatprep.subr.mxu0 0.0
    %v971 = vand.u32 %v738, 4294901760
    %v972 = vsub.f32 %v738, %v971
    %973 = vmatpush1.xpose.msra.mxu0 %v972
    %974 = vmatprep.subr.mxu0 0.0
    %975 = vmatpush1.xpose.msra.mxu0 0.0
    %976 = vmatprep.subr.mxu0 0.0
    %977 = vmatpush1.xpose.msra.mxu0 0.0
    %978 = vmatprep.subr.mxu0 0.0
    %979 = vmatpush1.xpose.msra.mxu0 0.0
    %980 = vmatprep.subr.mxu0 0.0
    %981 = vmatpush1.xpose.msra.mxu0 0.0
    %982 = vmatprep.subr.mxu0 0.0
    %983 = vmatpush1.xpose.msra.mxu0 0.0
    %984 = vmatprep.subr.mxu0 0.0
    %985 = vmatpush1.xpose.msra.mxu0 0.0
    %986 = vmatprep.subr.mxu0 0.0
    %987 = vmatpush1.xpose.msra.mxu0 0.0
    %988 = vmatprep.subr.mxu0 0.0
    %989 = vmatpush1.xpose.msra.mxu0 0.0
    %990 = vmatprep.subr.mxu0 0.0
    %991 = vmatpush1.xpose.msra.mxu0 0.0
    %992 = vmatprep.subr.mxu0 0.0
    %993 = vmatpush1.xpose.msra.mxu0 0.0
    %994 = vmatprep.subr.mxu0 0.0
    %995 = vmatpush1.xpose.msra.mxu0 0.0
    %996 = vmatprep.subr.mxu0 0.0
    %997 = vmatpush1.xpose.msra.mxu0 0.0
    %998 = vmatprep.subr.mxu0 0.0
    %999 = vmatpush1.xpose.msra.mxu0 0.0
    %1000 = vmatprep.subr.mxu0 0.0
    %1001 = vmatpush1.xpose.msra.mxu0 0.0
    %1002 = vmatprep.subr.mxu0 0.0
    %1003 = vmatpush1.xpose.msra.mxu0 0.0
    %1004 = vmatprep.subr.mxu0 0.0
    %1005 = vmatpush1.xpose.msra.mxu0 0.0
    %1006 = vmatprep.subr.mxu0 0.0
    %1007 = vmatpush1.xpose.msra.mxu0 0.0
    %1008 = vmatprep.subr.mxu0 0.0
    %1009 = vmatpush1.xpose.msra.mxu0 0.0
    %1010 = vmatprep.subr.mxu0 0.0
    %1011 = vmatpush1.xpose.msra.mxu0 0.0
    %1012 = vmatprep.subr.mxu0 0.0
    %1013 = vmatpush1.xpose.msra.mxu0 0.0
    %1014 = vmatprep.subr.mxu0 0.0
    %1015 = vmatpush1.xpose.msra.mxu0 0.0
    %1016 = vmatprep.subr.mxu0 0.0
    %1017 = vmatpush1.xpose.msra.mxu0 0.0
    %1018 = vmatprep.subr.mxu0 0.0
    %1019 = vmatpush1.xpose.msra.mxu0 0.0
    %1020 = vmatprep.subr.mxu0 0.0
    %1021 = vmatpush1.xpose.msra.mxu0 0.0
    %1022 = vmatprep.subr.mxu0 0.0
    %1023 = vmatpush1.xpose.msra.mxu0 0.0
    %1024 = vmatprep.subr.mxu0 0.0
    %1025 = vmatpush1.xpose.msra.mxu0 0.0
    %1026 = vmatprep.subr.mxu0 0.0
    %1027 = vmatpush1.xpose.msra.mxu0 0.0
    %1028 = vmatprep.subr.mxu0 0.0
    %1029 = vmatpush1.xpose.msra.mxu0 0.0
    %1030 = vmatprep.mubr.f32.mxu0 0.0
    %v1031 = vand.u32 %v724, 4294901760
    %v1032 = vsub.f32 %v724, %v1031
    %1033 = vmatmul.mubr.f32.gmra.mrb[0].mxu0 %v1032
    %v1034 = vpop.f32.mrb[0].mxu0
    %v1035 = vadd.f32 %v937, %v1034
    %v1036 = vpop.f32.mrb[0].mxu0
    %1037 = vmatprep.mubr.f32.mxu0 0.0
    %v1038 = vand.u32 %v726, 4294901760
    %v1039 = vsub.f32 %v726, %v1038
    %1040 = vmatmul.mubr.f32.gmra.mrb[0].mxu0 %v1039
    %v1041 = vpop.f32.mrb[0].mxu0
    %v1042 = vadd.f32 %v943, %v1041
    %v1043 = vpop.f32.mrb[0].mxu0
    %1044 = vmatprep.mubr.f32.mxu0 0.0
    %v1045 = vand.u32 %v728, 4294901760
    %v1046 = vsub.f32 %v728, %v1045
    %1047 = vmatmul.mubr.f32.gmra.mrb[0].mxu0 %v1046
    %v1048 = vpop.f32.mrb[0].mxu0
    %v1049 = vadd.f32 %v949, %v1048
    %v1050 = vpop.f32.mrb[0].mxu0
    %1051 = vmatprep.mubr.f32.mxu0 0.0
    %v1052 = vand.u32 %v730, 4294901760
    %v1053 = vsub.f32 %v730, %v1052
    %1054 = vmatmul.mubr.f32.gmra.mrb[0].mxu0 %v1053
    %v1055 = vpop.f32.mrb[0].mxu0
    %v1056 = vadd.f32 %v955, %v1055
    %v1057 = vpop.f32.mrb[0].mxu0
    %1058 = vdwg.mxu0
    %1059 = vmatprep.subr.mxu0 0.0
    %v1060 = vand.u32 %v732, 4294901760
    %1061 = vmatpush1.xpose.msra.mxu0 %v1060
    %1062 = vmatprep.subr.mxu0 0.0
    %v1063 = vand.u32 %v734, 4294901760
    %1064 = vmatpush1.xpose.msra.mxu0 %v1063
    %1065 = vmatprep.subr.mxu0 0.0
    %v1066 = vand.u32 %v736, 4294901760
    %1067 = vmatpush1.xpose.msra.mxu0 %v1066
    %1068 = vmatprep.subr.mxu0 0.0
    %v1069 = vand.u32 %v738, 4294901760
    %1070 = vmatpush1.xpose.msra.mxu0 %v1069
    %1071 = vmatprep.subr.mxu0 0.0
    %1072 = vmatpush1.xpose.msra.mxu0 0.0
    %1073 = vmatprep.subr.mxu0 0.0
    %1074 = vmatpush1.xpose.msra.mxu0 0.0
    %1075 = vmatprep.subr.mxu0 0.0
    %1076 = vmatpush1.xpose.msra.mxu0 0.0
    %1077 = vmatprep.subr.mxu0 0.0
    %1078 = vmatpush1.xpose.msra.mxu0 0.0
    %1079 = vmatprep.subr.mxu0 0.0
    %1080 = vmatpush1.xpose.msra.mxu0 0.0
    %1081 = vmatprep.subr.mxu0 0.0
    %1082 = vmatpush1.xpose.msra.mxu0 0.0
    %1083 = vmatprep.subr.mxu0 0.0
    %1084 = vmatpush1.xpose.msra.mxu0 0.0
    %1085 = vmatprep.subr.mxu0 0.0
    %1086 = vmatpush1.xpose.msra.mxu0 0.0
    %1087 = vmatprep.subr.mxu0 0.0
    %1088 = vmatpush1.xpose.msra.mxu0 0.0
    %1089 = vmatprep.subr.mxu0 0.0
    %1090 = vmatpush1.xpose.msra.mxu0 0.0
    %1091 = vmatprep.subr.mxu0 0.0
    %1092 = vmatpush1.xpose.msra.mxu0 0.0
    %1093 = vmatprep.subr.mxu0 0.0
    %1094 = vmatpush1.xpose.msra.mxu0 0.0
    %1095 = vmatprep.subr.mxu0 0.0
    %1096 = vmatpush1.xpose.msra.mxu0 0.0
    %1097 = vmatprep.subr.mxu0 0.0
    %1098 = vmatpush1.xpose.msra.mxu0 0.0
    %1099 = vmatprep.subr.mxu0 0.0
    %1100 = vmatpush1.xpose.msra.mxu0 0.0
    %1101 = vmatprep.subr.mxu0 0.0
    %1102 = vmatpush1.xpose.msra.mxu0 0.0
    %1103 = vmatprep.subr.mxu0 0.0
    %1104 = vmatpush1.xpose.msra.mxu0 0.0
    %1105 = vmatprep.subr.mxu0 0.0
    %1106 = vmatpush1.xpose.msra.mxu0 0.0
    %1107 = vmatprep.subr.mxu0 0.0
    %1108 = vmatpush1.xpose.msra.mxu0 0.0
    %1109 = vmatprep.subr.mxu0 0.0
    %1110 = vmatpush1.xpose.msra.mxu0 0.0
    %1111 = vmatprep.subr.mxu0 0.0
    %1112 = vmatpush1.xpose.msra.mxu0 0.0
    %1113 = vmatprep.subr.mxu0 0.0
    %1114 = vmatpush1.xpose.msra.mxu0 0.0
    %1115 = vmatprep.subr.mxu0 0.0
    %1116 = vmatpush1.xpose.msra.mxu0 0.0
    %1117 = vmatprep.subr.mxu0 0.0
    %1118 = vmatpush1.xpose.msra.mxu0 0.0
    %1119 = vmatprep.subr.mxu0 0.0
    %1120 = vmatpush1.xpose.msra.mxu0 0.0
    %1121 = vmatprep.subr.mxu0 0.0
    %1122 = vmatpush1.xpose.msra.mxu0 0.0
    %1123 = vmatprep.subr.mxu0 0.0
    %1124 = vmatpush1.xpose.msra.mxu0 0.0
    %1125 = vmatprep.subr.mxu0 0.0
    %1126 = vmatpush1.xpose.msra.mxu0 0.0
    %1127 = vmatprep.mubr.f32.mxu0 0.0
    %v1128 = vand.u32 %v724, 4294901760
    %v1129 = vsub.f32 %v724, %v1128
    %v1130 = vand.u32 %v1129, 4294901760
    %1131 = vmatmul.mubr.f32.gmra.mrb[0].mxu0 %v1130
    %v1132 = vpop.f32.mrb[0].mxu0
    %v1133 = vadd.f32 %v1035, %v1132
    %v1134 = vpop.f32.mrb[0].mxu0
    %1135 = vmatprep.mubr.f32.mxu0 0.0
    %v1136 = vand.u32 %v726, 4294901760
    %v1137 = vsub.f32 %v726, %v1136
    %v1138 = vand.u32 %v1137, 4294901760
    %1139 = vmatmul.mubr.f32.gmra.mrb[0].mxu0 %v1138
    %v1140 = vpop.f32.mrb[0].mxu0
    %v1141 = vadd.f32 %v1042, %v1140
    %v1142 = vpop.f32.mrb[0].mxu0
    %1143 = vmatprep.mubr.f32.mxu0 0.0
    %v1144 = vand.u32 %v728, 4294901760
    %v1145 = vsub.f32 %v728, %v1144
    %v1146 = vand.u32 %v1145, 4294901760
    %1147 = vmatmul.mubr.f32.gmra.mrb[0].mxu0 %v1146
    %v1148 = vpop.f32.mrb[0].mxu0
    %v1149 = vadd.f32 %v1049, %v1148
    %v1150 = vpop.f32.mrb[0].mxu0
    %1151 = vmatprep.mubr.f32.mxu0 0.0
    %v1152 = vand.u32 %v730, 4294901760
    %v1153 = vsub.f32 %v730, %v1152
    %v1154 = vand.u32 %v1153, 4294901760
    %1155 = vmatmul.mubr.f32.gmra.mrb[0].mxu0 %v1154
    %v1156 = vpop.f32.mrb[0].mxu0
    %v1157 = vadd.f32 %v1056, %v1156
    %v1158 = vpop.f32.mrb[0].mxu0
    %1159 = vdwg.mxu0
    %1160 = vmatprep.subr.mxu0 0.0
    %v1161 = vand.u32 %v732, 4294901760
    %v1162 = vsub.f32 %v732, %v1161
    %v1163 = vand.u32 %v1162, 4294901760
    %1164 = vmatpush1.xpose.msra.mxu0 %v1163
    %1165 = vmatprep.subr.mxu0 0.0
    %v1166 = vand.u32 %v734, 4294901760
    %v1167 = vsub.f32 %v734, %v1166
    %v1168 = vand.u32 %v1167, 4294901760
    %1169 = vmatpush1.xpose.msra.mxu0 %v1168
    %1170 = vmatprep.subr.mxu0 0.0
    %v1171 = vand.u32 %v736, 4294901760
    %v1172 = vsub.f32 %v736, %v1171
    %v1173 = vand.u32 %v1172, 4294901760
    %1174 = vmatpush1.xpose.msra.mxu0 %v1173
    %1175 = vmatprep.subr.mxu0 0.0
    %v1176 = vand.u32 %v738, 4294901760
    %v1177 = vsub.f32 %v738, %v1176
    %v1178 = vand.u32 %v1177, 4294901760
    %1179 = vmatpush1.xpose.msra.mxu0 %v1178
    %1180 = vmatprep.subr.mxu0 0.0
    %1181 = vmatpush1.xpose.msra.mxu0 0.0
    %1182 = vmatprep.subr.mxu0 0.0
    %1183 = vmatpush1.xpose.msra.mxu0 0.0
    %1184 = vmatprep.subr.mxu0 0.0
    %1185 = vmatpush1.xpose.msra.mxu0 0.0
    %1186 = vmatprep.subr.mxu0 0.0
    %1187 = vmatpush1.xpose.msra.mxu0 0.0
    %1188 = vmatprep.subr.mxu0 0.0
    %1189 = vmatpush1.xpose.msra.mxu0 0.0
    %1190 = vmatprep.subr.mxu0 0.0
    %1191 = vmatpush1.xpose.msra.mxu0 0.0
    %1192 = vmatprep.subr.mxu0 0.0
    %1193 = vmatpush1.xpose.msra.mxu0 0.0
    %1194 = vmatprep.subr.mxu0 0.0
    %1195 = vmatpush1.xpose.msra.mxu0 0.0
    %1196 = vmatprep.subr.mxu0 0.0
    %1197 = vmatpush1.xpose.msra.mxu0 0.0
    %1198 = vmatprep.subr.mxu0 0.0
    %1199 = vmatpush1.xpose.msra.mxu0 0.0
    %1200 = vmatprep.subr.mxu0 0.0
    %1201 = vmatpush1.xpose.msra.mxu0 0.0
    %1202 = vmatprep.subr.mxu0 0.0
    %1203 = vmatpush1.xpose.msra.mxu0 0.0
    %1204 = vmatprep.subr.mxu0 0.0
    %1205 = vmatpush1.xpose.msra.mxu0 0.0
    %1206 = vmatprep.subr.mxu0 0.0
    %1207 = vmatpush1.xpose.msra.mxu0 0.0
    %1208 = vmatprep.subr.mxu0 0.0
    %1209 = vmatpush1.xpose.msra.mxu0 0.0
    %1210 = vmatprep.subr.mxu0 0.0
    %1211 = vmatpush1.xpose.msra.mxu0 0.0
    %1212 = vmatprep.subr.mxu0 0.0
    %1213 = vmatpush1.xpose.msra.mxu0 0.0
    %1214 = vmatprep.subr.mxu0 0.0
    %1215 = vmatpush1.xpose.msra.mxu0 0.0
    %1216 = vmatprep.subr.mxu0 0.0
    %1217 = vmatpush1.xpose.msra.mxu0 0.0
    %1218 = vmatprep.subr.mxu0 0.0
    %1219 = vmatpush1.xpose.msra.mxu0 0.0
    %1220 = vmatprep.subr.mxu0 0.0
    %1221 = vmatpush1.xpose.msra.mxu0 0.0
    %1222 = vmatprep.subr.mxu0 0.0
    %1223 = vmatpush1.xpose.msra.mxu0 0.0
    %1224 = vmatprep.subr.mxu0 0.0
    %1225 = vmatpush1.xpose.msra.mxu0 0.0
    %1226 = vmatprep.subr.mxu0 0.0
    %1227 = vmatpush1.xpose.msra.mxu0 0.0
    %1228 = vmatprep.subr.mxu0 0.0
    %1229 = vmatpush1.xpose.msra.mxu0 0.0
    %1230 = vmatprep.subr.mxu0 0.0
    %1231 = vmatpush1.xpose.msra.mxu0 0.0
    %1232 = vmatprep.subr.mxu0 0.0
    %1233 = vmatpush1.xpose.msra.mxu0 0.0
    %1234 = vmatprep.subr.mxu0 0.0
    %1235 = vmatpush1.xpose.msra.mxu0 0.0
    %1236 = vmatprep.mubr.f32.mxu0 0.0
    %v1237 = vand.u32 %v724, 4294901760
    %1238 = vmatmul.mubr.f32.gmra.mrb[0].mxu0 %v1237
    %v1239 = vpop.f32.mrb[0].mxu0
    %v1240 = vadd.f32 %v1133, %v1239
    %v1241 = vpop.f32.mrb[0].mxu0
    %1242 = vmatprep.mubr.f32.mxu0 0.0
    %v1243 = vand.u32 %v726, 4294901760
    %1244 = vmatmul.mubr.f32.gmra.mrb[0].mxu0 %v1243
    %v1245 = vpop.f32.mrb[0].mxu0
    %v1246 = vadd.f32 %v1141, %v1245
    %v1247 = vpop.f32.mrb[0].mxu0
    %1248 = vmatprep.mubr.f32.mxu0 0.0
    %v1249 = vand.u32 %v728, 4294901760
    %1250 = vmatmul.mubr.f32.gmra.mrb[0].mxu0 %v1249
    %v1251 = vpop.f32.mrb[0].mxu0
    %v1252 = vadd.f32 %v1149, %v1251
    %v1253 = vpop.f32.mrb[0].mxu0
    %1254 = vmatprep.mubr.f32.mxu0 0.0
    %v1255 = vand.u32 %v730, 4294901760
    %1256 = vmatmul.mubr.f32.gmra.mrb[0].mxu0 %v1255
    %v1257 = vpop.f32.mrb[0].mxu0
    %v1258 = vadd.f32 %v1157, %v1257
    %v1259 = vpop.f32.mrb[0].mxu0
    %1260 = vdwg.mxu0
    %1261 = vmatprep.subr.mxu0 0.0
    %v1262 = vand.u32 %v732, 4294901760
    %1263 = vmatpush1.xpose.msra.mxu0 %v1262
    %1264 = vmatprep.subr.mxu0 0.0
    %v1265 = vand.u32 %v734, 4294901760
    %1266 = vmatpush1.xpose.msra.mxu0 %v1265
    %1267 = vmatprep.subr.mxu0 0.0
    %v1268 = vand.u32 %v736, 4294901760
    %1269 = vmatpush1.xpose.msra.mxu0 %v1268
    %1270 = vmatprep.subr.mxu0 0.0
    %v1271 = vand.u32 %v738, 4294901760
    %1272 = vmatpush1.xpose.msra.mxu0 %v1271
    %1273 = vmatprep.subr.mxu0 0.0
    %1274 = vmatpush1.xpose.msra.mxu0 0.0
    %1275 = vmatprep.subr.mxu0 0.0
    %1276 = vmatpush1.xpose.msra.mxu0 0.0
    %1277 = vmatprep.subr.mxu0 0.0
    %1278 = vmatpush1.xpose.msra.mxu0 0.0
    %1279 = vmatprep.subr.mxu0 0.0
    %1280 = vmatpush1.xpose.msra.mxu0 0.0
    %1281 = vmatprep.subr.mxu0 0.0
    %1282 = vmatpush1.xpose.msra.mxu0 0.0
    %1283 = vmatprep.subr.mxu0 0.0
    %1284 = vmatpush1.xpose.msra.mxu0 0.0
    %1285 = vmatprep.subr.mxu0 0.0
    %1286 = vmatpush1.xpose.msra.mxu0 0.0
    %1287 = vmatprep.subr.mxu0 0.0
    %1288 = vmatpush1.xpose.msra.mxu0 0.0
    %1289 = vmatprep.subr.mxu0 0.0
    %1290 = vmatpush1.xpose.msra.mxu0 0.0
    %1291 = vmatprep.subr.mxu0 0.0
    %1292 = vmatpush1.xpose.msra.mxu0 0.0
    %1293 = vmatprep.subr.mxu0 0.0
    %1294 = vmatpush1.xpose.msra.mxu0 0.0
    %1295 = vmatprep.subr.mxu0 0.0
    %1296 = vmatpush1.xpose.msra.mxu0 0.0
    %1297 = vmatprep.subr.mxu0 0.0
    %1298 = vmatpush1.xpose.msra.mxu0 0.0
    %1299 = vmatprep.subr.mxu0 0.0
    %1300 = vmatpush1.xpose.msra.mxu0 0.0
    %1301 = vmatprep.subr.mxu0 0.0
    %1302 = vmatpush1.xpose.msra.mxu0 0.0
    %1303 = vmatprep.subr.mxu0 0.0
    %1304 = vmatpush1.xpose.msra.mxu0 0.0
    %1305 = vmatprep.subr.mxu0 0.0
    %1306 = vmatpush1.xpose.msra.mxu0 0.0
    %1307 = vmatprep.subr.mxu0 0.0
    %1308 = vmatpush1.xpose.msra.mxu0 0.0
    %1309 = vmatprep.subr.mxu0 0.0
    %1310 = vmatpush1.xpose.msra.mxu0 0.0
    %1311 = vmatprep.subr.mxu0 0.0
    %1312 = vmatpush1.xpose.msra.mxu0 0.0
    %1313 = vmatprep.subr.mxu0 0.0
    %1314 = vmatpush1.xpose.msra.mxu0 0.0
    %1315 = vmatprep.subr.mxu0 0.0
    %1316 = vmatpush1.xpose.msra.mxu0 0.0
    %1317 = vmatprep.subr.mxu0 0.0
    %1318 = vmatpush1.xpose.msra.mxu0 0.0
    %1319 = vmatprep.subr.mxu0 0.0
    %1320 = vmatpush1.xpose.msra.mxu0 0.0
    %1321 = vmatprep.subr.mxu0 0.0
    %1322 = vmatpush1.xpose.msra.mxu0 0.0
    %1323 = vmatprep.subr.mxu0 0.0
    %1324 = vmatpush1.xpose.msra.mxu0 0.0
    %1325 = vmatprep.subr.mxu0 0.0
    %1326 = vmatpush1.xpose.msra.mxu0 0.0
    %1327 = vmatprep.subr.mxu0 0.0
    %1328 = vmatpush1.xpose.msra.mxu0 0.0
    %1329 = vmatprep.mubr.f32.mxu0 0.0
    %v1330 = vand.u32 %v724, 4294901760
    %1331 = vmatmul.mubr.f32.gmra.mrb[0].mxu0 %v1330
    %v1332 = vpop.f32.mrb[0].mxu0
    %v1333 = vadd.f32 %v1240, %v1332
    %v1334 = vpop.f32.mrb[0].mxu0
    %1335 = vmatprep.mubr.f32.mxu0 0.0
    %v1336 = vand.u32 %v726, 4294901760
    %1337 = vmatmul.mubr.f32.gmra.mrb[0].mxu0 %v1336
    %v1338 = vpop.f32.mrb[0].mxu0
    %v1339 = vadd.f32 %v1246, %v1338
    %v1340 = vpop.f32.mrb[0].mxu0
    %1341 = vmatprep.mubr.f32.mxu0 0.0
    %v1342 = vand.u32 %v728, 4294901760
    %1343 = vmatmul.mubr.f32.gmra.mrb[0].mxu0 %v1342
    %v1344 = vpop.f32.mrb[0].mxu0
    %v1345 = vadd.f32 %v1252, %v1344
    %v1346 = vpop.f32.mrb[0].mxu0
    %1347 = vmatprep.mubr.f32.mxu0 0.0
    %v1348 = vand.u32 %v730, 4294901760
    %1349 = vmatmul.mubr.f32.gmra.mrb[0].mxu0 %v1348
    %v1350 = vpop.f32.mrb[0].mxu0
    %v1351 = vadd.f32 %v1258, %v1350
    %v1352 = vpop.f32.mrb[0].mxu0
    %1353 = vdwg.mxu0
    %v1354 = vsel %vm81, %v1333, -inf
    %1355 = vmax.xlane.f32.xlu0 %v1354
    %v1356 = vpop.xlane.xlu0 %1355
    %v1357 = vsel %vm81, %v1339, -inf
    %1358 = vmax.xlane.f32.xlu0 %v1357
    %v1359 = vpop.xlane.xlu0 %1358
    %v1360 = vsel %vm81, %v1345, -inf
    %1361 = vmax.xlane.f32.xlu0 %v1360
    %v1362 = vpop.xlane.xlu0 %1361
    %v1363 = vsel %vm81, %v1351, -inf
    %1364 = vmax.xlane.f32.xlu0 %v1363
    %v1365 = vpop.xlane.xlu0 %1364
    %v1366 = vsub.f32 %v1333, %v1356
    %v1367 = vsub.f32 %v1339, %v1359
    %v1368 = vsub.f32 %v1345, %v1362
    %v1369 = vsub.f32 %v1351, %v1365
    %v1370 = vmul.f32 %v1366, 1.442695
    %v1371 = vpow.pop %v1370
    %v1372 = vmul.f32 %v1367, 1.442695
    %v1373 = vpow.pop %v1372
    %v1374 = vmul.f32 %v1368, 1.442695
    %v1375 = vpow.pop %v1374
    %v1376 = vmul.f32 %v1369, 1.442695
    %v1377 = vpow.pop %v1376
    %v1378 = vsel %vm81, %v1371, 0.0
    %1379 = vadd.xlane.f32.xlu0 %v1378
    %v1380 = vpop.xlane.xlu0 %1379
    %v1381 = vsel %vm81, %v1373, 0.0
    %1382 = vadd.xlane.f32.xlu0 %v1381
    %v1383 = vpop.xlane.xlu0 %1382
    %v1384 = vsel %vm81, %v1375, 0.0
    %1385 = vadd.xlane.f32.xlu0 %v1384
    %v1386 = vpop.xlane.xlu0 %1385
    %v1387 = vsel %vm81, %v1377, 0.0
    %1388 = vadd.xlane.f32.xlu0 %v1387
    %v1389 = vpop.xlane.xlu0 %1388
    %v1390 = vrcp.pop %v1380
    %v1391 = vmul.f32 %v1371, %v1390
    %v1392 = vrcp.pop %v1383
    %v1393 = vmul.f32 %v1373, %v1392
    %v1394 = vrcp.pop %v1386
    %v1395 = vmul.f32 %v1375, %v1394
    %v1396 = vrcp.pop %v1389
    %v1397 = vmul.f32 %v1377, %v1396
    %1398 = vrot.lane.b32.xlu0 %v687, 64
    %v1399 = vpop.permute.xlu0 %1398
    %1400 = vrot.lane.b32.xlu0 %v693, 64
    %v1401 = vpop.permute.xlu0 %1400
    %1402 = vrot.lane.b32.xlu0 %v699, 64
    %v1403 = vpop.permute.xlu0 %1402
    %1404 = vrot.lane.b32.xlu0 %v705, 64
    %v1405 = vpop.permute.xlu0 %1404
    %v1411 = vsel %vm81, %v1391, 0
    %v1414 = vsel %vm81, %v1393, 0
    %v1417 = vsel %vm81, %v1395, 0
    %v1420 = vsel %vm81, %v1397, 0
    %1422 = vmatprep.subr.mxu0 0.0
    %v1423 = vand.u32 %v1399, 4294901760
    %1424 = vmatpush1.msra.mxu0 %v1423
    %1425 = vmatprep.subr.mxu0 0.0
    %v1426 = vand.u32 %v1401, 4294901760
    %1427 = vmatpush1.msra.mxu0 %v1426
    %1428 = vmatprep.subr.mxu0 0.0
    %v1429 = vand.u32 %v1403, 4294901760
    %1430 = vmatpush1.msra.mxu0 %v1429
    %1431 = vmatprep.subr.mxu0 0.0
    %v1432 = vand.u32 %v1405, 4294901760
    %1433 = vmatpush1.msra.mxu0 %v1432
    %1434 = vmatprep.subr.mxu0 0.0
    %1435 = vmatpush1.msra.mxu0 0.0
    %1436 = vmatprep.subr.mxu0 0.0
    %1437 = vmatpush1.msra.mxu0 0.0
    %1438 = vmatprep.subr.mxu0 0.0
    %1439 = vmatpush1.msra.mxu0 0.0
    %1440 = vmatprep.subr.mxu0 0.0
    %1441 = vmatpush1.msra.mxu0 0.0
    %1442 = vmatprep.subr.mxu0 0.0
    %1443 = vmatpush1.msra.mxu0 0.0
    %1444 = vmatprep.subr.mxu0 0.0
    %1445 = vmatpush1.msra.mxu0 0.0
    %1446 = vmatprep.subr.mxu0 0.0
    %1447 = vmatpush1.msra.mxu0 0.0
    %1448 = vmatprep.subr.mxu0 0.0
    %1449 = vmatpush1.msra.mxu0 0.0
    %1450 = vmatprep.subr.mxu0 0.0
    %1451 = vmatpush1.msra.mxu0 0.0
    %1452 = vmatprep.subr.mxu0 0.0
    %1453 = vmatpush1.msra.mxu0 0.0
    %1454 = vmatprep.subr.mxu0 0.0
    %1455 = vmatpush1.msra.mxu0 0.0
    %1456 = vmatprep.subr.mxu0 0.0
    %1457 = vmatpush1.msra.mxu0 0.0
    %1458 = vmatprep.subr.mxu0 0.0
    %1459 = vmatpush1.msra.mxu0 0.0
    %1460 = vmatprep.subr.mxu0 0.0
    %1461 = vmatpush1.msra.mxu0 0.0
    %1462 = vmatprep.subr.mxu0 0.0
    %1463 = vmatpush1.msra.mxu0 0.0
    %1464 = vmatprep.subr.mxu0 0.0
    %1465 = vmatpush1.msra.mxu0 0.0
    %1466 = vmatprep.subr.mxu0 0.0
    %1467 = vmatpush1.msra.mxu0 0.0
    %1468 = vmatprep.subr.mxu0 0.0
    %1469 = vmatpush1.msra.mxu0 0.0
    %1470 = vmatprep.subr.mxu0 0.0
    %1471 = vmatpush1.msra.mxu0 0.0
    %1472 = vmatprep.subr.mxu0 0.0
    %1473 = vmatpush1.msra.mxu0 0.0
    %1474 = vmatprep.subr.mxu0 0.0
    %1475 = vmatpush1.msra.mxu0 0.0
    %1476 = vmatprep.subr.mxu0 0.0
    %1477 = vmatpush1.msra.mxu0 0.0
    %1478 = vmatprep.subr.mxu0 0.0
    %1479 = vmatpush1.msra.mxu0 0.0
    %1480 = vmatprep.subr.mxu0 0.0
    %1481 = vmatpush1.msra.mxu0 0.0
    %1482 = vmatprep.subr.mxu0 0.0
    %1483 = vmatpush1.msra.mxu0 0.0
    %1484 = vmatprep.subr.mxu0 0.0
    %1485 = vmatpush1.msra.mxu0 0.0
    %1486 = vmatprep.subr.mxu0 0.0
    %1487 = vmatpush1.msra.mxu0 0.0
    %1488 = vmatprep.subr.mxu0 0.0
    %1489 = vmatpush1.msra.mxu0 0.0
    %1490 = vmatprep.mubr.f32.mxu0 0.0
    %v1491 = vand.u32 %v1411, 4294901760
    %v1492 = vsub.f32 %v1411, %v1491
    %v1493 = vand.u32 %v1492, 4294901760
    %v1494 = vsub.f32 %v1492, %v1493
    %v1495 = vand.u32 %v1494, 4294901760
    %1496 = vmatmul.mubr.f32.gmra.mrb[0].mxu0 %v1495
    %v1497 = vpop.f32.mrb[0].mxu0
    %v1498 = vadd.f32 0.0, %v1497
    %v1499 = vpop.f32.mrb[0].mxu0
    %1500 = vmatprep.mubr.f32.mxu0 0.0
    %v1501 = vand.u32 %v1414, 4294901760
    %v1502 = vsub.f32 %v1414, %v1501
    %v1503 = vand.u32 %v1502, 4294901760
    %v1504 = vsub.f32 %v1502, %v1503
    %v1505 = vand.u32 %v1504, 4294901760
    %1506 = vmatmul.mubr.f32.gmra.mrb[0].mxu0 %v1505
    %v1507 = vpop.f32.mrb[0].mxu0
    %v1508 = vadd.f32 0.0, %v1507
    %v1509 = vpop.f32.mrb[0].mxu0
    %1510 = vmatprep.mubr.f32.mxu0 0.0
    %v1511 = vand.u32 %v1417, 4294901760
    %v1512 = vsub.f32 %v1417, %v1511
    %v1513 = vand.u32 %v1512, 4294901760
    %v1514 = vsub.f32 %v1512, %v1513
    %v1515 = vand.u32 %v1514, 4294901760
    %1516 = vmatmul.mubr.f32.gmra.mrb[0].mxu0 %v1515
    %v1517 = vpop.f32.mrb[0].mxu0
    %v1518 = vadd.f32 0.0, %v1517
    %v1519 = vpop.f32.mrb[0].mxu0
    %1520 = vmatprep.mubr.f32.mxu0 0.0
    %v1521 = vand.u32 %v1420, 4294901760
    %v1522 = vsub.f32 %v1420, %v1521
    %v1523 = vand.u32 %v1522, 4294901760
    %v1524 = vsub.f32 %v1522, %v1523
    %v1525 = vand.u32 %v1524, 4294901760
    %1526 = vmatmul.mubr.f32.gmra.mrb[0].mxu0 %v1525
    %v1527 = vpop.f32.mrb[0].mxu0
    %v1528 = vadd.f32 0.0, %v1527
    %v1529 = vpop.f32.mrb[0].mxu0
    %1530 = vdwg.mxu0
    %1531 = vmatprep.subr.mxu0 0.0
    %v1532 = vand.u32 %v1399, 4294901760
    %v1533 = vsub.f32 %v1399, %v1532
    %v1534 = vand.u32 %v1533, 4294901760
    %v1535 = vsub.f32 %v1533, %v1534
    %v1536 = vand.u32 %v1535, 4294901760
    %1537 = vmatpush1.msra.mxu0 %v1536
    %1538 = vmatprep.subr.mxu0 0.0
    %v1539 = vand.u32 %v1401, 4294901760
    %v1540 = vsub.f32 %v1401, %v1539
    %v1541 = vand.u32 %v1540, 4294901760
    %v1542 = vsub.f32 %v1540, %v1541
    %v1543 = vand.u32 %v1542, 4294901760
    %1544 = vmatpush1.msra.mxu0 %v1543
    %1545 = vmatprep.subr.mxu0 0.0
    %v1546 = vand.u32 %v1403, 4294901760
    %v1547 = vsub.f32 %v1403, %v1546
    %v1548 = vand.u32 %v1547, 4294901760
    %v1549 = vsub.f32 %v1547, %v1548
    %v1550 = vand.u32 %v1549, 4294901760
    %1551 = vmatpush1.msra.mxu0 %v1550
    %1552 = vmatprep.subr.mxu0 0.0
    %v1553 = vand.u32 %v1405, 4294901760
    %v1554 = vsub.f32 %v1405, %v1553
    %v1555 = vand.u32 %v1554, 4294901760
    %v1556 = vsub.f32 %v1554, %v1555
    %v1557 = vand.u32 %v1556, 4294901760
    %1558 = vmatpush1.msra.mxu0 %v1557
    %1559 = vmatprep.subr.mxu0 0.0
    %1560 = vmatpush1.msra.mxu0 0.0
    %1561 = vmatprep.subr.mxu0 0.0
    %1562 = vmatpush1.msra.mxu0 0.0
    %1563 = vmatprep.subr.mxu0 0.0
    %1564 = vmatpush1.msra.mxu0 0.0
    %1565 = vmatprep.subr.mxu0 0.0
    %1566 = vmatpush1.msra.mxu0 0.0
    %1567 = vmatprep.subr.mxu0 0.0
    %1568 = vmatpush1.msra.mxu0 0.0
    %1569 = vmatprep.subr.mxu0 0.0
    %1570 = vmatpush1.msra.mxu0 0.0
    %1571 = vmatprep.subr.mxu0 0.0
    %1572 = vmatpush1.msra.mxu0 0.0
    %1573 = vmatprep.subr.mxu0 0.0
    %1574 = vmatpush1.msra.mxu0 0.0
    %1575 = vmatprep.subr.mxu0 0.0
    %1576 = vmatpush1.msra.mxu0 0.0
    %1577 = vmatprep.subr.mxu0 0.0
    %1578 = vmatpush1.msra.mxu0 0.0
    %1579 = vmatprep.subr.mxu0 0.0
    %1580 = vmatpush1.msra.mxu0 0.0
    %1581 = vmatprep.subr.mxu0 0.0
    %1582 = vmatpush1.msra.mxu0 0.0
    %1583 = vmatprep.subr.mxu0 0.0
    %1584 = vmatpush1.msra.mxu0 0.0
    %1585 = vmatprep.subr.mxu0 0.0
    %1586 = vmatpush1.msra.mxu0 0.0
    %1587 = vmatprep.subr.mxu0 0.0
    %1588 = vmatpush1.msra.mxu0 0.0
    %1589 = vmatprep.subr.mxu0 0.0
    %1590 = vmatpush1.msra.mxu0 0.0
    %1591 = vmatprep.subr.mxu0 0.0
    %1592 = vmatpush1.msra.mxu0 0.0
    %1593 = vmatprep.subr.mxu0 0.0
    %1594 = vmatpush1.msra.mxu0 0.0
    %1595 = vmatprep.subr.mxu0 0.0
    %1596 = vmatpush1.msra.mxu0 0.0
    %1597 = vmatprep.subr.mxu0 0.0
    %1598 = vmatpush1.msra.mxu0 0.0
    %1599 = vmatprep.subr.mxu0 0.0
    %1600 = vmatpush1.msra.mxu0 0.0
    %1601 = vmatprep.subr.mxu0 0.0
    %1602 = vmatpush1.msra.mxu0 0.0
    %1603 = vmatprep.subr.mxu0 0.0
    %1604 = vmatpush1.msra.mxu0 0.0
    %1605 = vmatprep.subr.mxu0 0.0
    %1606 = vmatpush1.msra.mxu0 0.0
    %1607 = vmatprep.subr.mxu0 0.0
    %1608 = vmatpush1.msra.mxu0 0.0
    %1609 = vmatprep.subr.mxu0 0.0
    %1610 = vmatpush1.msra.mxu0 0.0
    %1611 = vmatprep.subr.mxu0 0.0
    %1612 = vmatpush1.msra.mxu0 0.0
    %1613 = vmatprep.subr.mxu0 0.0
    %1614 = vmatpush1.msra.mxu0 0.0
    %1615 = vmatprep.mubr.f32.mxu0 0.0
    %v1616 = vand.u32 %v1411, 4294901760
    %1617 = vmatmul.mubr.f32.gmra.mrb[0].mxu0 %v1616
    %v1618 = vpop.f32.mrb[0].mxu0
    %v1619 = vadd.f32 %v1498, %v1618
    %v1620 = vpop.f32.mrb[0].mxu0
    %1621 = vmatprep.mubr.f32.mxu0 0.0
    %v1622 = vand.u32 %v1414, 4294901760
    %1623 = vmatmul.mubr.f32.gmra.mrb[0].mxu0 %v1622
    %v1624 = vpop.f32.mrb[0].mxu0
    %v1625 = vadd.f32 %v1508, %v1624
    %v1626 = vpop.f32.mrb[0].mxu0
    %1627 = vmatprep.mubr.f32.mxu0 0.0
    %v1628 = vand.u32 %v1417, 4294901760
    %1629 = vmatmul.mubr.f32.gmra.mrb[0].mxu0 %v1628
    %v1630 = vpop.f32.mrb[0].mxu0
    %v1631 = vadd.f32 %v1518, %v1630
    %v1632 = vpop.f32.mrb[0].mxu0
    %1633 = vmatprep.mubr.f32.mxu0 0.0
    %v1634 = vand.u32 %v1420, 4294901760
    %1635 = vmatmul.mubr.f32.gmra.mrb[0].mxu0 %v1634
    %v1636 = vpop.f32.mrb[0].mxu0
    %v1637 = vadd.f32 %v1528, %v1636
    %v1638 = vpop.f32.mrb[0].mxu0
    %1639 = vdwg.mxu0
    %1640 = vmatprep.subr.mxu0 0.0
    %v1641 = vand.u32 %v1399, 4294901760
    %v1642 = vsub.f32 %v1399, %v1641
    %1643 = vmatpush1.msra.mxu0 %v1642
    %1644 = vmatprep.subr.mxu0 0.0
    %v1645 = vand.u32 %v1401, 4294901760
    %v1646 = vsub.f32 %v1401, %v1645
    %1647 = vmatpush1.msra.mxu0 %v1646
    %1648 = vmatprep.subr.mxu0 0.0
    %v1649 = vand.u32 %v1403, 4294901760
    %v1650 = vsub.f32 %v1403, %v1649
    %1651 = vmatpush1.msra.mxu0 %v1650
    %1652 = vmatprep.subr.mxu0 0.0
    %v1653 = vand.u32 %v1405, 4294901760
    %v1654 = vsub.f32 %v1405, %v1653
    %1655 = vmatpush1.msra.mxu0 %v1654
    %1656 = vmatprep.subr.mxu0 0.0
    %1657 = vmatpush1.msra.mxu0 0.0
    %1658 = vmatprep.subr.mxu0 0.0
    %1659 = vmatpush1.msra.mxu0 0.0
    %1660 = vmatprep.subr.mxu0 0.0
    %1661 = vmatpush1.msra.mxu0 0.0
    %1662 = vmatprep.subr.mxu0 0.0
    %1663 = vmatpush1.msra.mxu0 0.0
    %1664 = vmatprep.subr.mxu0 0.0
    %1665 = vmatpush1.msra.mxu0 0.0
    %1666 = vmatprep.subr.mxu0 0.0
    %1667 = vmatpush1.msra.mxu0 0.0
    %1668 = vmatprep.subr.mxu0 0.0
    %1669 = vmatpush1.msra.mxu0 0.0
    %1670 = vmatprep.subr.mxu0 0.0
    %1671 = vmatpush1.msra.mxu0 0.0
    %1672 = vmatprep.subr.mxu0 0.0
    %1673 = vmatpush1.msra.mxu0 0.0
    %1674 = vmatprep.subr.mxu0 0.0
    %1675 = vmatpush1.msra.mxu0 0.0
    %1676 = vmatprep.subr.mxu0 0.0
    %1677 = vmatpush1.msra.mxu0 0.0
    %1678 = vmatprep.subr.mxu0 0.0
    %1679 = vmatpush1.msra.mxu0 0.0
    %1680 = vmatprep.subr.mxu0 0.0
    %1681 = vmatpush1.msra.mxu0 0.0
    %1682 = vmatprep.subr.mxu0 0.0
    %1683 = vmatpush1.msra.mxu0 0.0
    %1684 = vmatprep.subr.mxu0 0.0
    %1685 = vmatpush1.msra.mxu0 0.0
    %1686 = vmatprep.subr.mxu0 0.0
    %1687 = vmatpush1.msra.mxu0 0.0
    %1688 = vmatprep.subr.mxu0 0.0
    %1689 = vmatpush1.msra.mxu0 0.0
    %1690 = vmatprep.subr.mxu0 0.0
    %1691 = vmatpush1.msra.mxu0 0.0
    %1692 = vmatprep.subr.mxu0 0.0
    %1693 = vmatpush1.msra.mxu0 0.0
    %1694 = vmatprep.subr.mxu0 0.0
    %1695 = vmatpush1.msra.mxu0 0.0
    %1696 = vmatprep.subr.mxu0 0.0
    %1697 = vmatpush1.msra.mxu0 0.0
    %1698 = vmatprep.subr.mxu0 0.0
    %1699 = vmatpush1.msra.mxu0 0.0
    %1700 = vmatprep.subr.mxu0 0.0
    %1701 = vmatpush1.msra.mxu0 0.0
    %1702 = vmatprep.subr.mxu0 0.0
    %1703 = vmatpush1.msra.mxu0 0.0
    %1704 = vmatprep.subr.mxu0 0.0
    %1705 = vmatpush1.msra.mxu0 0.0
    %1706 = vmatprep.subr.mxu0 0.0
    %1707 = vmatpush1.msra.mxu0 0.0
    %1708 = vmatprep.subr.mxu0 0.0
    %1709 = vmatpush1.msra.mxu0 0.0
    %1710 = vmatprep.subr.mxu0 0.0
    %1711 = vmatpush1.msra.mxu0 0.0
    %1712 = vmatprep.mubr.f32.mxu0 0.0
    %v1713 = vand.u32 %v1411, 4294901760
    %v1714 = vsub.f32 %v1411, %v1713
    %1715 = vmatmul.mubr.f32.gmra.mrb[0].mxu0 %v1714
    %v1716 = vpop.f32.mrb[0].mxu0
    %v1717 = vadd.f32 %v1619, %v1716
    %v1718 = vpop.f32.mrb[0].mxu0
    %1719 = vmatprep.mubr.f32.mxu0 0.0
    %v1720 = vand.u32 %v1414, 4294901760
    %v1721 = vsub.f32 %v1414, %v1720
    %1722 = vmatmul.mubr.f32.gmra.mrb[0].mxu0 %v1721
    %v1723 = vpop.f32.mrb[0].mxu0
    %v1724 = vadd.f32 %v1625, %v1723
    %v1725 = vpop.f32.mrb[0].mxu0
    %1726 = vmatprep.mubr.f32.mxu0 0.0
    %v1727 = vand.u32 %v1417, 4294901760
    %v1728 = vsub.f32 %v1417, %v1727
    %1729 = vmatmul.mubr.f32.gmra.mrb[0].mxu0 %v1728
    %v1730 = vpop.f32.mrb[0].mxu0
    %v1731 = vadd.f32 %v1631, %v1730
    %v1732 = vpop.f32.mrb[0].mxu0
    %1733 = vmatprep.mubr.f32.mxu0 0.0
    %v1734 = vand.u32 %v1420, 4294901760
    %v1735 = vsub.f32 %v1420, %v1734
    %1736 = vmatmul.mubr.f32.gmra.mrb[0].mxu0 %v1735
    %v1737 = vpop.f32.mrb[0].mxu0
    %v1738 = vadd.f32 %v1637, %v1737
    %v1739 = vpop.f32.mrb[0].mxu0
    %1740 = vdwg.mxu0
    %1741 = vmatprep.subr.mxu0 0.0
    %v1742 = vand.u32 %v1399, 4294901760
    %1743 = vmatpush1.msra.mxu0 %v1742
    %1744 = vmatprep.subr.mxu0 0.0
    %v1745 = vand.u32 %v1401, 4294901760
    %1746 = vmatpush1.msra.mxu0 %v1745
    %1747 = vmatprep.subr.mxu0 0.0
    %v1748 = vand.u32 %v1403, 4294901760
    %1749 = vmatpush1.msra.mxu0 %v1748
    %1750 = vmatprep.subr.mxu0 0.0
    %v1751 = vand.u32 %v1405, 4294901760
    %1752 = vmatpush1.msra.mxu0 %v1751
    %1753 = vmatprep.subr.mxu0 0.0
    %1754 = vmatpush1.msra.mxu0 0.0
    %1755 = vmatprep.subr.mxu0 0.0
    %1756 = vmatpush1.msra.mxu0 0.0
    %1757 = vmatprep.subr.mxu0 0.0
    %1758 = vmatpush1.msra.mxu0 0.0
    %1759 = vmatprep.subr.mxu0 0.0
    %1760 = vmatpush1.msra.mxu0 0.0
    %1761 = vmatprep.subr.mxu0 0.0
    %1762 = vmatpush1.msra.mxu0 0.0
    %1763 = vmatprep.subr.mxu0 0.0
    %1764 = vmatpush1.msra.mxu0 0.0
    %1765 = vmatprep.subr.mxu0 0.0
    %1766 = vmatpush1.msra.mxu0 0.0
    %1767 = vmatprep.subr.mxu0 0.0
    %1768 = vmatpush1.msra.mxu0 0.0
    %1769 = vmatprep.subr.mxu0 0.0
    %1770 = vmatpush1.msra.mxu0 0.0
    %1771 = vmatprep.subr.mxu0 0.0
    %1772 = vmatpush1.msra.mxu0 0.0
    %1773 = vmatprep.subr.mxu0 0.0
    %1774 = vmatpush1.msra.mxu0 0.0
    %1775 = vmatprep.subr.mxu0 0.0
    %1776 = vmatpush1.msra.mxu0 0.0
    %1777 = vmatprep.subr.mxu0 0.0
    %1778 = vmatpush1.msra.mxu0 0.0
    %1779 = vmatprep.subr.mxu0 0.0
    %1780 = vmatpush1.msra.mxu0 0.0
    %1781 = vmatprep.subr.mxu0 0.0
    %1782 = vmatpush1.msra.mxu0 0.0
    %1783 = vmatprep.subr.mxu0 0.0
    %1784 = vmatpush1.msra.mxu0 0.0
    %1785 = vmatprep.subr.mxu0 0.0
    %1786 = vmatpush1.msra.mxu0 0.0
    %1787 = vmatprep.subr.mxu0 0.0
    %1788 = vmatpush1.msra.mxu0 0.0
    %1789 = vmatprep.subr.mxu0 0.0
    %1790 = vmatpush1.msra.mxu0 0.0
    %1791 = vmatprep.subr.mxu0 0.0
    %1792 = vmatpush1.msra.mxu0 0.0
    %1793 = vmatprep.subr.mxu0 0.0
    %1794 = vmatpush1.msra.mxu0 0.0
    %1795 = vmatprep.subr.mxu0 0.0
    %1796 = vmatpush1.msra.mxu0 0.0
    %1797 = vmatprep.subr.mxu0 0.0
    %1798 = vmatpush1.msra.mxu0 0.0
    %1799 = vmatprep.subr.mxu0 0.0
    %1800 = vmatpush1.msra.mxu0 0.0
    %1801 = vmatprep.subr.mxu0 0.0
    %1802 = vmatpush1.msra.mxu0 0.0
    %1803 = vmatprep.subr.mxu0 0.0
    %1804 = vmatpush1.msra.mxu0 0.0
    %1805 = vmatprep.subr.mxu0 0.0
    %1806 = vmatpush1.msra.mxu0 0.0
    %1807 = vmatprep.subr.mxu0 0.0
    %1808 = vmatpush1.msra.mxu0 0.0
    %1809 = vmatprep.mubr.f32.mxu0 0.0
    %v1810 = vand.u32 %v1411, 4294901760
    %v1811 = vsub.f32 %v1411, %v1810
    %v1812 = vand.u32 %v1811, 4294901760
    %1813 = vmatmul.mubr.f32.gmra.mrb[0].mxu0 %v1812
    %v1814 = vpop.f32.mrb[0].mxu0
    %v1815 = vadd.f32 %v1717, %v1814
    %v1816 = vpop.f32.mrb[0].mxu0
    %1817 = vmatprep.mubr.f32.mxu0 0.0
    %v1818 = vand.u32 %v1414, 4294901760
    %v1819 = vsub.f32 %v1414, %v1818
    %v1820 = vand.u32 %v1819, 4294901760
    %1821 = vmatmul.mubr.f32.gmra.mrb[0].mxu0 %v1820
    %v1822 = vpop.f32.mrb[0].mxu0
    %v1823 = vadd.f32 %v1724, %v1822
    %v1824 = vpop.f32.mrb[0].mxu0
    %1825 = vmatprep.mubr.f32.mxu0 0.0
    %v1826 = vand.u32 %v1417, 4294901760
    %v1827 = vsub.f32 %v1417, %v1826
    %v1828 = vand.u32 %v1827, 4294901760
    %1829 = vmatmul.mubr.f32.gmra.mrb[0].mxu0 %v1828
    %v1830 = vpop.f32.mrb[0].mxu0
    %v1831 = vadd.f32 %v1731, %v1830
    %v1832 = vpop.f32.mrb[0].mxu0
    %1833 = vmatprep.mubr.f32.mxu0 0.0
    %v1834 = vand.u32 %v1420, 4294901760
    %v1835 = vsub.f32 %v1420, %v1834
    %v1836 = vand.u32 %v1835, 4294901760
    %1837 = vmatmul.mubr.f32.gmra.mrb[0].mxu0 %v1836
    %v1838 = vpop.f32.mrb[0].mxu0
    %v1839 = vadd.f32 %v1738, %v1838
    %v1840 = vpop.f32.mrb[0].mxu0
    %1841 = vdwg.mxu0
    %1842 = vmatprep.subr.mxu0 0.0
    %v1843 = vand.u32 %v1399, 4294901760
    %v1844 = vsub.f32 %v1399, %v1843
    %v1845 = vand.u32 %v1844, 4294901760
    %1846 = vmatpush1.msra.mxu0 %v1845
    %1847 = vmatprep.subr.mxu0 0.0
    %v1848 = vand.u32 %v1401, 4294901760
    %v1849 = vsub.f32 %v1401, %v1848
    %v1850 = vand.u32 %v1849, 4294901760
    %1851 = vmatpush1.msra.mxu0 %v1850
    %1852 = vmatprep.subr.mxu0 0.0
    %v1853 = vand.u32 %v1403, 4294901760
    %v1854 = vsub.f32 %v1403, %v1853
    %v1855 = vand.u32 %v1854, 4294901760
    %1856 = vmatpush1.msra.mxu0 %v1855
    %1857 = vmatprep.subr.mxu0 0.0
    %v1858 = vand.u32 %v1405, 4294901760
    %v1859 = vsub.f32 %v1405, %v1858
    %v1860 = vand.u32 %v1859, 4294901760
    %1861 = vmatpush1.msra.mxu0 %v1860
    %1862 = vmatprep.subr.mxu0 0.0
    %1863 = vmatpush1.msra.mxu0 0.0
    %1864 = vmatprep.subr.mxu0 0.0
    %1865 = vmatpush1.msra.mxu0 0.0
    %1866 = vmatprep.subr.mxu0 0.0
    %1867 = vmatpush1.msra.mxu0 0.0
    %1868 = vmatprep.subr.mxu0 0.0
    %1869 = vmatpush1.msra.mxu0 0.0
    %1870 = vmatprep.subr.mxu0 0.0
    %1871 = vmatpush1.msra.mxu0 0.0
    %1872 = vmatprep.subr.mxu0 0.0
    %1873 = vmatpush1.msra.mxu0 0.0
    %1874 = vmatprep.subr.mxu0 0.0
    %1875 = vmatpush1.msra.mxu0 0.0
    %1876 = vmatprep.subr.mxu0 0.0
    %1877 = vmatpush1.msra.mxu0 0.0
    %1878 = vmatprep.subr.mxu0 0.0
    %1879 = vmatpush1.msra.mxu0 0.0
    %1880 = vmatprep.subr.mxu0 0.0
    %1881 = vmatpush1.msra.mxu0 0.0
    %1882 = vmatprep.subr.mxu0 0.0
    %1883 = vmatpush1.msra.mxu0 0.0
    %1884 = vmatprep.subr.mxu0 0.0
    %1885 = vmatpush1.msra.mxu0 0.0
    %1886 = vmatprep.subr.mxu0 0.0
    %1887 = vmatpush1.msra.mxu0 0.0
    %1888 = vmatprep.subr.mxu0 0.0
    %1889 = vmatpush1.msra.mxu0 0.0
    %1890 = vmatprep.subr.mxu0 0.0
    %1891 = vmatpush1.msra.mxu0 0.0
    %1892 = vmatprep.subr.mxu0 0.0
    %1893 = vmatpush1.msra.mxu0 0.0
    %1894 = vmatprep.subr.mxu0 0.0
    %1895 = vmatpush1.msra.mxu0 0.0
    %1896 = vmatprep.subr.mxu0 0.0
    %1897 = vmatpush1.msra.mxu0 0.0
    %1898 = vmatprep.subr.mxu0 0.0
    %1899 = vmatpush1.msra.mxu0 0.0
    %1900 = vmatprep.subr.mxu0 0.0
    %1901 = vmatpush1.msra.mxu0 0.0
    %1902 = vmatprep.subr.mxu0 0.0
    %1903 = vmatpush1.msra.mxu0 0.0
    %1904 = vmatprep.subr.mxu0 0.0
    %1905 = vmatpush1.msra.mxu0 0.0
    %1906 = vmatprep.subr.mxu0 0.0
    %1907 = vmatpush1.msra.mxu0 0.0
    %1908 = vmatprep.subr.mxu0 0.0
    %1909 = vmatpush1.msra.mxu0 0.0
    %1910 = vmatprep.subr.mxu0 0.0
    %1911 = vmatpush1.msra.mxu0 0.0
    %1912 = vmatprep.subr.mxu0 0.0
    %1913 = vmatpush1.msra.mxu0 0.0
    %1914 = vmatprep.subr.mxu0 0.0
    %1915 = vmatpush1.msra.mxu0 0.0
    %1916 = vmatprep.subr.mxu0 0.0
    %1917 = vmatpush1.msra.mxu0 0.0
    %1918 = vmatprep.mubr.f32.mxu0 0.0
    %v1919 = vand.u32 %v1411, 4294901760
    %1920 = vmatmul.mubr.f32.gmra.mrb[0].mxu0 %v1919
    %v1921 = vpop.f32.mrb[0].mxu0
    %v1922 = vadd.f32 %v1815, %v1921
    %v1923 = vpop.f32.mrb[0].mxu0
    %1924 = vmatprep.mubr.f32.mxu0 0.0
    %v1925 = vand.u32 %v1414, 4294901760
    %1926 = vmatmul.mubr.f32.gmra.mrb[0].mxu0 %v1925
    %v1927 = vpop.f32.mrb[0].mxu0
    %v1928 = vadd.f32 %v1823, %v1927
    %v1929 = vpop.f32.mrb[0].mxu0
    %1930 = vmatprep.mubr.f32.mxu0 0.0
    %v1931 = vand.u32 %v1417, 4294901760
    %1932 = vmatmul.mubr.f32.gmra.mrb[0].mxu0 %v1931
    %v1933 = vpop.f32.mrb[0].mxu0
    %v1934 = vadd.f32 %v1831, %v1933
    %v1935 = vpop.f32.mrb[0].mxu0
    %1936 = vmatprep.mubr.f32.mxu0 0.0
    %v1937 = vand.u32 %v1420, 4294901760
    %1938 = vmatmul.mubr.f32.gmra.mrb[0].mxu0 %v1937
    %v1939 = vpop.f32.mrb[0].mxu0
    %v1940 = vadd.f32 %v1839, %v1939
    %v1941 = vpop.f32.mrb[0].mxu0
    %1942 = vdwg.mxu0
    %1943 = vmatprep.subr.mxu0 0.0
    %v1944 = vand.u32 %v1399, 4294901760
    %1945 = vmatpush1.msra.mxu0 %v1944
    %1946 = vmatprep.subr.mxu0 0.0
    %v1947 = vand.u32 %v1401, 4294901760
    %1948 = vmatpush1.msra.mxu0 %v1947
    %1949 = vmatprep.subr.mxu0 0.0
    %v1950 = vand.u32 %v1403, 4294901760
    %1951 = vmatpush1.msra.mxu0 %v1950
    %1952 = vmatprep.subr.mxu0 0.0
    %v1953 = vand.u32 %v1405, 4294901760
    %1954 = vmatpush1.msra.mxu0 %v1953
    %1955 = vmatprep.subr.mxu0 0.0
    %1956 = vmatpush1.msra.mxu0 0.0
    %1957 = vmatprep.subr.mxu0 0.0
    %1958 = vmatpush1.msra.mxu0 0.0
    %1959 = vmatprep.subr.mxu0 0.0
    %1960 = vmatpush1.msra.mxu0 0.0
    %1961 = vmatprep.subr.mxu0 0.0
    %1962 = vmatpush1.msra.mxu0 0.0
    %1963 = vmatprep.subr.mxu0 0.0
    %1964 = vmatpush1.msra.mxu0 0.0
    %1965 = vmatprep.subr.mxu0 0.0
    %1966 = vmatpush1.msra.mxu0 0.0
    %1967 = vmatprep.subr.mxu0 0.0
    %1968 = vmatpush1.msra.mxu0 0.0
    %1969 = vmatprep.subr.mxu0 0.0
    %1970 = vmatpush1.msra.mxu0 0.0
    %1971 = vmatprep.subr.mxu0 0.0
    %1972 = vmatpush1.msra.mxu0 0.0
    %1973 = vmatprep.subr.mxu0 0.0
    %1974 = vmatpush1.msra.mxu0 0.0
    %1975 = vmatprep.subr.mxu0 0.0
    %1976 = vmatpush1.msra.mxu0 0.0
    %1977 = vmatprep.subr.mxu0 0.0
    %1978 = vmatpush1.msra.mxu0 0.0
    %1979 = vmatprep.subr.mxu0 0.0
    %1980 = vmatpush1.msra.mxu0 0.0
    %1981 = vmatprep.subr.mxu0 0.0
    %1982 = vmatpush1.msra.mxu0 0.0
    %1983 = vmatprep.subr.mxu0 0.0
    %1984 = vmatpush1.msra.mxu0 0.0
    %1985 = vmatprep.subr.mxu0 0.0
    %1986 = vmatpush1.msra.mxu0 0.0
    %1987 = vmatprep.subr.mxu0 0.0
    %1988 = vmatpush1.msra.mxu0 0.0
    %1989 = vmatprep.subr.mxu0 0.0
    %1990 = vmatpush1.msra.mxu0 0.0
    %1991 = vmatprep.subr.mxu0 0.0
    %1992 = vmatpush1.msra.mxu0 0.0
    %1993 = vmatprep.subr.mxu0 0.0
    %1994 = vmatpush1.msra.mxu0 0.0
    %1995 = vmatprep.subr.mxu0 0.0
    %1996 = vmatpush1.msra.mxu0 0.0
    %1997 = vmatprep.subr.mxu0 0.0
    %1998 = vmatpush1.msra.mxu0 0.0
    %1999 = vmatprep.subr.mxu0 0.0
    %2000 = vmatpush1.msra.mxu0 0.0
    %2001 = vmatprep.subr.mxu0 0.0
    %2002 = vmatpush1.msra.mxu0 0.0
    %2003 = vmatprep.subr.mxu0 0.0
    %2004 = vmatpush1.msra.mxu0 0.0
    %2005 = vmatprep.subr.mxu0 0.0
    %2006 = vmatpush1.msra.mxu0 0.0
    %2007 = vmatprep.subr.mxu0 0.0
    %2008 = vmatpush1.msra.mxu0 0.0
    %2009 = vmatprep.subr.mxu0 0.0
    %2010 = vmatpush1.msra.mxu0 0.0
    %2011 = vmatprep.mubr.f32.mxu0 0.0
    %v2012 = vand.u32 %v1411, 4294901760
    %2013 = vmatmul.mubr.f32.gmra.mrb[0].mxu0 %v2012
    %v2014 = vpop.f32.mrb[0].mxu0
    %v2015 = vadd.f32 %v1922, %v2014
    %v2016 = vpop.f32.mrb[0].mxu0
    %2017 = vmatprep.mubr.f32.mxu0 0.0
    %v2018 = vand.u32 %v1414, 4294901760
    %2019 = vmatmul.mubr.f32.gmra.mrb[0].mxu0 %v2018
    %v2020 = vpop.f32.mrb[0].mxu0
    %v2021 = vadd.f32 %v1928, %v2020
    %v2022 = vpop.f32.mrb[0].mxu0
    %2023 = vmatprep.mubr.f32.mxu0 0.0
    %v2024 = vand.u32 %v1417, 4294901760
    %2025 = vmatmul.mubr.f32.gmra.mrb[0].mxu0 %v2024
    %v2026 = vpop.f32.mrb[0].mxu0
    %v2027 = vadd.f32 %v1934, %v2026
    %v2028 = vpop.f32.mrb[0].mxu0
    %2029 = vmatprep.mubr.f32.mxu0 0.0
    %v2030 = vand.u32 %v1420, 4294901760
    %2031 = vmatmul.mubr.f32.gmra.mrb[0].mxu0 %v2030
    %v2032 = vpop.f32.mrb[0].mxu0
    %v2033 = vadd.f32 %v1940, %v2032
    %v2034 = vpop.f32.mrb[0].mxu0
    %2035 = vdwg.mxu0
    %v2036 = vld [vmem:[#allocation7] sm:$0xff]
    %v2037 = vld [vmem:[#allocation7 + $0x8] sm:$0xff]
    %v2038 = vld [vmem:[#allocation7 + $0x10] sm:$0xff]
    %v2039 = vld [vmem:[#allocation7 + $0x18] sm:$0xff]
    %v2041 = vsel %vm81, %v2015, 0
    %v2044 = vsel %vm81, %v2021, 0
    %v2047 = vsel %vm81, %v2027, 0
    %v2050 = vsel %vm81, %v2033, 0
    %2052 = vmatprep.subr.mxu0 0.0
    %v2053 = vand.u32 %v2036, 4294901760
    %2054 = vmatpush1.msra.mxu0 %v2053
    %2055 = vmatprep.subr.mxu0 0.0
    %v2056 = vand.u32 %v2037, 4294901760
    %2057 = vmatpush1.msra.mxu0 %v2056
    %2058 = vmatprep.subr.mxu0 0.0
    %v2059 = vand.u32 %v2038, 4294901760
    %2060 = vmatpush1.msra.mxu0 %v2059
    %2061 = vmatprep.subr.mxu0 0.0
    %v2062 = vand.u32 %v2039, 4294901760
    %2063 = vmatpush1.msra.mxu0 %v2062
    %2064 = vmatprep.subr.mxu0 0.0
    %2065 = vmatpush1.msra.mxu0 0.0
    %2066 = vmatprep.subr.mxu0 0.0
    %2067 = vmatpush1.msra.mxu0 0.0
    %2068 = vmatprep.subr.mxu0 0.0
    %2069 = vmatpush1.msra.mxu0 0.0
    %2070 = vmatprep.subr.mxu0 0.0
    %2071 = vmatpush1.msra.mxu0 0.0
    %2072 = vmatprep.subr.mxu0 0.0
    %2073 = vmatpush1.msra.mxu0 0.0
    %2074 = vmatprep.subr.mxu0 0.0
    %2075 = vmatpush1.msra.mxu0 0.0
    %2076 = vmatprep.subr.mxu0 0.0
    %2077 = vmatpush1.msra.mxu0 0.0
    %2078 = vmatprep.subr.mxu0 0.0
    %2079 = vmatpush1.msra.mxu0 0.0
    %2080 = vmatprep.subr.mxu0 0.0
    %2081 = vmatpush1.msra.mxu0 0.0
    %2082 = vmatprep.subr.mxu0 0.0
    %2083 = vmatpush1.msra.mxu0 0.0
    %2084 = vmatprep.subr.mxu0 0.0
    %2085 = vmatpush1.msra.mxu0 0.0
    %2086 = vmatprep.subr.mxu0 0.0
    %2087 = vmatpush1.msra.mxu0 0.0
    %2088 = vmatprep.subr.mxu0 0.0
    %2089 = vmatpush1.msra.mxu0 0.0
    %2090 = vmatprep.subr.mxu0 0.0
    %2091 = vmatpush1.msra.mxu0 0.0
    %2092 = vmatprep.subr.mxu0 0.0
    %2093 = vmatpush1.msra.mxu0 0.0
    %2094 = vmatprep.subr.mxu0 0.0
    %2095 = vmatpush1.msra.mxu0 0.0
    %2096 = vmatprep.subr.mxu0 0.0
    %2097 = vmatpush1.msra.mxu0 0.0
    %2098 = vmatprep.subr.mxu0 0.0
    %2099 = vmatpush1.msra.mxu0 0.0
    %2100 = vmatprep.subr.mxu0 0.0
    %2101 = vmatpush1.msra.mxu0 0.0
    %2102 = vmatprep.subr.mxu0 0.0
    %2103 = vmatpush1.msra.mxu0 0.0
    %2104 = vmatprep.subr.mxu0 0.0
    %2105 = vmatpush1.msra.mxu0 0.0
    %2106 = vmatprep.subr.mxu0 0.0
    %2107 = vmatpush1.msra.mxu0 0.0
    %2108 = vmatprep.subr.mxu0 0.0
    %2109 = vmatpush1.msra.mxu0 0.0
    %2110 = vmatprep.subr.mxu0 0.0
    %2111 = vmatpush1.msra.mxu0 0.0
    %2112 = vmatprep.subr.mxu0 0.0
    %2113 = vmatpush1.msra.mxu0 0.0
    %2114 = vmatprep.subr.mxu0 0.0
    %2115 = vmatpush1.msra.mxu0 0.0
    %2116 = vmatprep.subr.mxu0 0.0
    %2117 = vmatpush1.msra.mxu0 0.0
    %2118 = vmatprep.subr.mxu0 0.0
    %2119 = vmatpush1.msra.mxu0 0.0
    %2120 = vmatprep.mubr.f32.mxu0 0.0
    %v2121 = vand.u32 %v2041, 4294901760
    %v2122 = vsub.f32 %v2041, %v2121
    %v2123 = vand.u32 %v2122, 4294901760
    %v2124 = vsub.f32 %v2122, %v2123
    %v2125 = vand.u32 %v2124, 4294901760
    %2126 = vmatmul.mubr.f32.gmra.mrb[0].mxu0 %v2125
    %v2127 = vpop.f32.mrb[0].mxu0
    %v2128 = vadd.f32 %v73, %v2127
    %v2129 = vpop.f32.mrb[0].mxu0
    %2130 = vmatprep.mubr.f32.mxu0 0.0
    %v2131 = vand.u32 %v2044, 4294901760
    %v2132 = vsub.f32 %v2044, %v2131
    %v2133 = vand.u32 %v2132, 4294901760
    %v2134 = vsub.f32 %v2132, %v2133
    %v2135 = vand.u32 %v2134, 4294901760
    %2136 = vmatmul.mubr.f32.gmra.mrb[0].mxu0 %v2135
    %v2137 = vpop.f32.mrb[0].mxu0
    %v2138 = vadd.f32 %v74, %v2137
    %v2139 = vpop.f32.mrb[0].mxu0
    %2140 = vmatprep.mubr.f32.mxu0 0.0
    %v2141 = vand.u32 %v2047, 4294901760
    %v2142 = vsub.f32 %v2047, %v2141
    %v2143 = vand.u32 %v2142, 4294901760
    %v2144 = vsub.f32 %v2142, %v2143
    %v2145 = vand.u32 %v2144, 4294901760
    %2146 = vmatmul.mubr.f32.gmra.mrb[0].mxu0 %v2145
    %v2147 = vpop.f32.mrb[0].mxu0
    %v2148 = vadd.f32 %v75, %v2147
    %v2149 = vpop.f32.mrb[0].mxu0
    %2150 = vmatprep.mubr.f32.mxu0 0.0
    %v2151 = vand.u32 %v2050, 4294901760
    %v2152 = vsub.f32 %v2050, %v2151
    %v2153 = vand.u32 %v2152, 4294901760
    %v2154 = vsub.f32 %v2152, %v2153
    %v2155 = vand.u32 %v2154, 4294901760
    %2156 = vmatmul.mubr.f32.gmra.mrb[0].mxu0 %v2155
    %v2157 = vpop.f32.mrb[0].mxu0
    %v2158 = vadd.f32 %v76, %v2157
    %v2159 = vpop.f32.mrb[0].mxu0
    %2160 = vdwg.mxu0
    %2161 = vmatprep.subr.mxu0 0.0
    %v2162 = vand.u32 %v2036, 4294901760
    %v2163 = vsub.f32 %v2036, %v2162
    %v2164 = vand.u32 %v2163, 4294901760
    %v2165 = vsub.f32 %v2163, %v2164
    %v2166 = vand.u32 %v2165, 4294901760
    %2167 = vmatpush1.msra.mxu0 %v2166
    %2168 = vmatprep.subr.mxu0 0.0
    %v2169 = vand.u32 %v2037, 4294901760
    %v2170 = vsub.f32 %v2037, %v2169
    %v2171 = vand.u32 %v2170, 4294901760
    %v2172 = vsub.f32 %v2170, %v2171
    %v2173 = vand.u32 %v2172, 4294901760
    %2174 = vmatpush1.msra.mxu0 %v2173
    %2175 = vmatprep.subr.mxu0 0.0
    %v2176 = vand.u32 %v2038, 4294901760
    %v2177 = vsub.f32 %v2038, %v2176
    %v2178 = vand.u32 %v2177, 4294901760
    %v2179 = vsub.f32 %v2177, %v2178
    %v2180 = vand.u32 %v2179, 4294901760
    %2181 = vmatpush1.msra.mxu0 %v2180
    %2182 = vmatprep.subr.mxu0 0.0
    %v2183 = vand.u32 %v2039, 4294901760
    %v2184 = vsub.f32 %v2039, %v2183
    %v2185 = vand.u32 %v2184, 4294901760
    %v2186 = vsub.f32 %v2184, %v2185
    %v2187 = vand.u32 %v2186, 4294901760
    %2188 = vmatpush1.msra.mxu0 %v2187
    %2189 = vmatprep.subr.mxu0 0.0
    %2190 = vmatpush1.msra.mxu0 0.0
    %2191 = vmatprep.subr.mxu0 0.0
    %2192 = vmatpush1.msra.mxu0 0.0
    %2193 = vmatprep.subr.mxu0 0.0
    %2194 = vmatpush1.msra.mxu0 0.0
    %2195 = vmatprep.subr.mxu0 0.0
    %2196 = vmatpush1.msra.mxu0 0.0
    %2197 = vmatprep.subr.mxu0 0.0
    %2198 = vmatpush1.msra.mxu0 0.0
    %2199 = vmatprep.subr.mxu0 0.0
    %2200 = vmatpush1.msra.mxu0 0.0
    %2201 = vmatprep.subr.mxu0 0.0
    %2202 = vmatpush1.msra.mxu0 0.0
    %2203 = vmatprep.subr.mxu0 0.0
    %2204 = vmatpush1.msra.mxu0 0.0
    %2205 = vmatprep.subr.mxu0 0.0
    %2206 = vmatpush1.msra.mxu0 0.0
    %2207 = vmatprep.subr.mxu0 0.0
    %2208 = vmatpush1.msra.mxu0 0.0
    %2209 = vmatprep.subr.mxu0 0.0
    %2210 = vmatpush1.msra.mxu0 0.0
    %2211 = vmatprep.subr.mxu0 0.0
    %2212 = vmatpush1.msra.mxu0 0.0
    %2213 = vmatprep.subr.mxu0 0.0
    %2214 = vmatpush1.msra.mxu0 0.0
    %2215 = vmatprep.subr.mxu0 0.0
    %2216 = vmatpush1.msra.mxu0 0.0
    %2217 = vmatprep.subr.mxu0 0.0
    %2218 = vmatpush1.msra.mxu0 0.0
    %2219 = vmatprep.subr.mxu0 0.0
    %2220 = vmatpush1.msra.mxu0 0.0
    %2221 = vmatprep.subr.mxu0 0.0
    %2222 = vmatpush1.msra.mxu0 0.0
    %2223 = vmatprep.subr.mxu0 0.0
    %2224 = vmatpush1.msra.mxu0 0.0
    %2225 = vmatprep.subr.mxu0 0.0
    %2226 = vmatpush1.msra.mxu0 0.0
    %2227 = vmatprep.subr.mxu0 0.0
    %2228 = vmatpush1.msra.mxu0 0.0
    %2229 = vmatprep.subr.mxu0 0.0
    %2230 = vmatpush1.msra.mxu0 0.0
    %2231 = vmatprep.subr.mxu0 0.0
    %2232 = vmatpush1.msra.mxu0 0.0
    %2233 = vmatprep.subr.mxu0 0.0
    %2234 = vmatpush1.msra.mxu0 0.0
    %2235 = vmatprep.subr.mxu0 0.0
    %2236 = vmatpush1.msra.mxu0 0.0
    %2237 = vmatprep.subr.mxu0 0.0
    %2238 = vmatpush1.msra.mxu0 0.0
    %2239 = vmatprep.subr.mxu0 0.0
    %2240 = vmatpush1.msra.mxu0 0.0
    %2241 = vmatprep.subr.mxu0 0.0
    %2242 = vmatpush1.msra.mxu0 0.0
    %2243 = vmatprep.subr.mxu0 0.0
    %2244 = vmatpush1.msra.mxu0 0.0
    %2245 = vmatprep.mubr.f32.mxu0 0.0
    %v2246 = vand.u32 %v2041, 4294901760
    %2247 = vmatmul.mubr.f32.gmra.mrb[0].mxu0 %v2246
    %v2248 = vpop.f32.mrb[0].mxu0
    %v2249 = vadd.f32 %v2128, %v2248
    %v2250 = vpop.f32.mrb[0].mxu0
    %2251 = vmatprep.mubr.f32.mxu0 0.0
    %v2252 = vand.u32 %v2044, 4294901760
    %2253 = vmatmul.mubr.f32.gmra.mrb[0].mxu0 %v2252
    %v2254 = vpop.f32.mrb[0].mxu0
    %v2255 = vadd.f32 %v2138, %v2254
    %v2256 = vpop.f32.mrb[0].mxu0
    %2257 = vmatprep.mubr.f32.mxu0 0.0
    %v2258 = vand.u32 %v2047, 4294901760
    %2259 = vmatmul.mubr.f32.gmra.mrb[0].mxu0 %v2258
    %v2260 = vpop.f32.mrb[0].mxu0
    %v2261 = vadd.f32 %v2148, %v2260
    %v2262 = vpop.f32.mrb[0].mxu0
    %2263 = vmatprep.mubr.f32.mxu0 0.0
    %v2264 = vand.u32 %v2050, 4294901760
    %2265 = vmatmul.mubr.f32.gmra.mrb[0].mxu0 %v2264
    %v2266 = vpop.f32.mrb[0].mxu0
    %v2267 = vadd.f32 %v2158, %v2266
    %v2268 = vpop.f32.mrb[0].mxu0
    %2269 = vdwg.mxu0
    %2270 = vmatprep.subr.mxu0 0.0
    %v2271 = vand.u32 %v2036, 4294901760
    %v2272 = vsub.f32 %v2036, %v2271
    %2273 = vmatpush1.msra.mxu0 %v2272
    %2274 = vmatprep.subr.mxu0 0.0
    %v2275 = vand.u32 %v2037, 4294901760
    %v2276 = vsub.f32 %v2037, %v2275
    %2277 = vmatpush1.msra.mxu0 %v2276
    %2278 = vmatprep.subr.mxu0 0.0
    %v2279 = vand.u32 %v2038, 4294901760
    %v2280 = vsub.f32 %v2038, %v2279
    %2281 = vmatpush1.msra.mxu0 %v2280
    %2282 = vmatprep.subr.mxu0 0.0
    %v2283 = vand.u32 %v2039, 4294901760
    %v2284 = vsub.f32 %v2039, %v2283
    %2285 = vmatpush1.msra.mxu0 %v2284
    %2286 = vmatprep.subr.mxu0 0.0
    %2287 = vmatpush1.msra.mxu0 0.0
    %2288 = vmatprep.subr.mxu0 0.0
    %2289 = vmatpush1.msra.mxu0 0.0
    %2290 = vmatprep.subr.mxu0 0.0
    %2291 = vmatpush1.msra.mxu0 0.0
    %2292 = vmatprep.subr.mxu0 0.0
    %2293 = vmatpush1.msra.mxu0 0.0
    %2294 = vmatprep.subr.mxu0 0.0
    %2295 = vmatpush1.msra.mxu0 0.0
    %2296 = vmatprep.subr.mxu0 0.0
    %2297 = vmatpush1.msra.mxu0 0.0
    %2298 = vmatprep.subr.mxu0 0.0
    %2299 = vmatpush1.msra.mxu0 0.0
    %2300 = vmatprep.subr.mxu0 0.0
    %2301 = vmatpush1.msra.mxu0 0.0
    %2302 = vmatprep.subr.mxu0 0.0
    %2303 = vmatpush1.msra.mxu0 0.0
    %2304 = vmatprep.subr.mxu0 0.0
    %2305 = vmatpush1.msra.mxu0 0.0
    %2306 = vmatprep.subr.mxu0 0.0
    %2307 = vmatpush1.msra.mxu0 0.0
    %2308 = vmatprep.subr.mxu0 0.0
    %2309 = vmatpush1.msra.mxu0 0.0
    %2310 = vmatprep.subr.mxu0 0.0
    %2311 = vmatpush1.msra.mxu0 0.0
    %2312 = vmatprep.subr.mxu0 0.0
    %2313 = vmatpush1.msra.mxu0 0.0
    %2314 = vmatprep.subr.mxu0 0.0
    %2315 = vmatpush1.msra.mxu0 0.0
    %2316 = vmatprep.subr.mxu0 0.0
    %2317 = vmatpush1.msra.mxu0 0.0
    %2318 = vmatprep.subr.mxu0 0.0
    %2319 = vmatpush1.msra.mxu0 0.0
    %2320 = vmatprep.subr.mxu0 0.0
    %2321 = vmatpush1.msra.mxu0 0.0
    %2322 = vmatprep.subr.mxu0 0.0
    %2323 = vmatpush1.msra.mxu0 0.0
    %2324 = vmatprep.subr.mxu0 0.0
    %2325 = vmatpush1.msra.mxu0 0.0
    %2326 = vmatprep.subr.mxu0 0.0
    %2327 = vmatpush1.msra.mxu0 0.0
    %2328 = vmatprep.subr.mxu0 0.0
    %2329 = vmatpush1.msra.mxu0 0.0
    %2330 = vmatprep.subr.mxu0 0.0
    %2331 = vmatpush1.msra.mxu0 0.0
    %2332 = vmatprep.subr.mxu0 0.0
    %2333 = vmatpush1.msra.mxu0 0.0
    %2334 = vmatprep.subr.mxu0 0.0
    %2335 = vmatpush1.msra.mxu0 0.0
    %2336 = vmatprep.subr.mxu0 0.0
    %2337 = vmatpush1.msra.mxu0 0.0
    %2338 = vmatprep.subr.mxu0 0.0
    %2339 = vmatpush1.msra.mxu0 0.0
    %2340 = vmatprep.subr.mxu0 0.0
    %2341 = vmatpush1.msra.mxu0 0.0
    %2342 = vmatprep.mubr.f32.mxu0 0.0
    %v2343 = vand.u32 %v2041, 4294901760
    %v2344 = vsub.f32 %v2041, %v2343
    %2345 = vmatmul.mubr.f32.gmra.mrb[0].mxu0 %v2344
    %v2346 = vpop.f32.mrb[0].mxu0
    %v2347 = vadd.f32 %v2249, %v2346
    %v2348 = vpop.f32.mrb[0].mxu0
    %2349 = vmatprep.mubr.f32.mxu0 0.0
    %v2350 = vand.u32 %v2044, 4294901760
    %v2351 = vsub.f32 %v2044, %v2350
    %2352 = vmatmul.mubr.f32.gmra.mrb[0].mxu0 %v2351
    %v2353 = vpop.f32.mrb[0].mxu0
    %v2354 = vadd.f32 %v2255, %v2353
    %v2355 = vpop.f32.mrb[0].mxu0
    %2356 = vmatprep.mubr.f32.mxu0 0.0
    %v2357 = vand.u32 %v2047, 4294901760
    %v2358 = vsub.f32 %v2047, %v2357
    %2359 = vmatmul.mubr.f32.gmra.mrb[0].mxu0 %v2358
    %v2360 = vpop.f32.mrb[0].mxu0
    %v2361 = vadd.f32 %v2261, %v2360
    %v2362 = vpop.f32.mrb[0].mxu0
    %2363 = vmatprep.mubr.f32.mxu0 0.0
    %v2364 = vand.u32 %v2050, 4294901760
    %v2365 = vsub.f32 %v2050, %v2364
    %2366 = vmatmul.mubr.f32.gmra.mrb[0].mxu0 %v2365
    %v2367 = vpop.f32.mrb[0].mxu0
    %v2368 = vadd.f32 %v2267, %v2367
    %v2369 = vpop.f32.mrb[0].mxu0
    %2370 = vdwg.mxu0
    %2371 = vmatprep.subr.mxu0 0.0
    %v2372 = vand.u32 %v2036, 4294901760
    %2373 = vmatpush1.msra.mxu0 %v2372
    %2374 = vmatprep.subr.mxu0 0.0
    %v2375 = vand.u32 %v2037, 4294901760
    %2376 = vmatpush1.msra.mxu0 %v2375
    %2377 = vmatprep.subr.mxu0 0.0
    %v2378 = vand.u32 %v2038, 4294901760
    %2379 = vmatpush1.msra.mxu0 %v2378
    %2380 = vmatprep.subr.mxu0 0.0
    %v2381 = vand.u32 %v2039, 4294901760
    %2382 = vmatpush1.msra.mxu0 %v2381
    %2383 = vmatprep.subr.mxu0 0.0
    %2384 = vmatpush1.msra.mxu0 0.0
    %2385 = vmatprep.subr.mxu0 0.0
    %2386 = vmatpush1.msra.mxu0 0.0
    %2387 = vmatprep.subr.mxu0 0.0
    %2388 = vmatpush1.msra.mxu0 0.0
    %2389 = vmatprep.subr.mxu0 0.0
    %2390 = vmatpush1.msra.mxu0 0.0
    %2391 = vmatprep.subr.mxu0 0.0
    %2392 = vmatpush1.msra.mxu0 0.0
    %2393 = vmatprep.subr.mxu0 0.0
    %2394 = vmatpush1.msra.mxu0 0.0
    %2395 = vmatprep.subr.mxu0 0.0
    %2396 = vmatpush1.msra.mxu0 0.0
    %2397 = vmatprep.subr.mxu0 0.0
    %2398 = vmatpush1.msra.mxu0 0.0
    %2399 = vmatprep.subr.mxu0 0.0
    %2400 = vmatpush1.msra.mxu0 0.0
    %2401 = vmatprep.subr.mxu0 0.0
    %2402 = vmatpush1.msra.mxu0 0.0
    %2403 = vmatprep.subr.mxu0 0.0
    %2404 = vmatpush1.msra.mxu0 0.0
    %2405 = vmatprep.subr.mxu0 0.0
    %2406 = vmatpush1.msra.mxu0 0.0
    %2407 = vmatprep.subr.mxu0 0.0
    %2408 = vmatpush1.msra.mxu0 0.0
    %2409 = vmatprep.subr.mxu0 0.0
    %2410 = vmatpush1.msra.mxu0 0.0
    %2411 = vmatprep.subr.mxu0 0.0
    %2412 = vmatpush1.msra.mxu0 0.0
    %2413 = vmatprep.subr.mxu0 0.0
    %2414 = vmatpush1.msra.mxu0 0.0
    %2415 = vmatprep.subr.mxu0 0.0
    %2416 = vmatpush1.msra.mxu0 0.0
    %2417 = vmatprep.subr.mxu0 0.0
    %2418 = vmatpush1.msra.mxu0 0.0
    %2419 = vmatprep.subr.mxu0 0.0
    %2420 = vmatpush1.msra.mxu0 0.0
    %2421 = vmatprep.subr.mxu0 0.0
    %2422 = vmatpush1.msra.mxu0 0.0
    %2423 = vmatprep.subr.mxu0 0.0
    %2424 = vmatpush1.msra.mxu0 0.0
    %2425 = vmatprep.subr.mxu0 0.0
    %2426 = vmatpush1.msra.mxu0 0.0
    %2427 = vmatprep.subr.mxu0 0.0
    %2428 = vmatpush1.msra.mxu0 0.0
    %2429 = vmatprep.subr.mxu0 0.0
    %2430 = vmatpush1.msra.mxu0 0.0
    %2431 = vmatprep.subr.mxu0 0.0
    %2432 = vmatpush1.msra.mxu0 0.0
    %2433 = vmatprep.subr.mxu0 0.0
    %2434 = vmatpush1.msra.mxu0 0.0
    %2435 = vmatprep.subr.mxu0 0.0
    %2436 = vmatpush1.msra.mxu0 0.0
    %2437 = vmatprep.subr.mxu0 0.0
    %2438 = vmatpush1.msra.mxu0 0.0
    %2439 = vmatprep.mubr.f32.mxu0 0.0
    %v2440 = vand.u32 %v2041, 4294901760
    %v2441 = vsub.f32 %v2041, %v2440
    %v2442 = vand.u32 %v2441, 4294901760
    %2443 = vmatmul.mubr.f32.gmra.mrb[0].mxu0 %v2442
    %v2444 = vpop.f32.mrb[0].mxu0
    %v2445 = vadd.f32 %v2347, %v2444
    %v2446 = vpop.f32.mrb[0].mxu0
    %2447 = vmatprep.mubr.f32.mxu0 0.0
    %v2448 = vand.u32 %v2044, 4294901760
    %v2449 = vsub.f32 %v2044, %v2448
    %v2450 = vand.u32 %v2449, 4294901760
    %2451 = vmatmul.mubr.f32.gmra.mrb[0].mxu0 %v2450
    %v2452 = vpop.f32.mrb[0].mxu0
    %v2453 = vadd.f32 %v2354, %v2452
    %v2454 = vpop.f32.mrb[0].mxu0
    %2455 = vmatprep.mubr.f32.mxu0 0.0
    %v2456 = vand.u32 %v2047, 4294901760
    %v2457 = vsub.f32 %v2047, %v2456
    %v2458 = vand.u32 %v2457, 4294901760
    %2459 = vmatmul.mubr.f32.gmra.mrb[0].mxu0 %v2458
    %v2460 = vpop.f32.mrb[0].mxu0
    %v2461 = vadd.f32 %v2361, %v2460
    %v2462 = vpop.f32.mrb[0].mxu0
    %2463 = vmatprep.mubr.f32.mxu0 0.0
    %v2464 = vand.u32 %v2050, 4294901760
    %v2465 = vsub.f32 %v2050, %v2464
    %v2466 = vand.u32 %v2465, 4294901760
    %2467 = vmatmul.mubr.f32.gmra.mrb[0].mxu0 %v2466
    %v2468 = vpop.f32.mrb[0].mxu0
    %v2469 = vadd.f32 %v2368, %v2468
    %v2470 = vpop.f32.mrb[0].mxu0
    %2471 = vdwg.mxu0
    %2472 = vmatprep.subr.mxu0 0.0
    %v2473 = vand.u32 %v2036, 4294901760
    %v2474 = vsub.f32 %v2036, %v2473
    %v2475 = vand.u32 %v2474, 4294901760
    %2476 = vmatpush1.msra.mxu0 %v2475
    %2477 = vmatprep.subr.mxu0 0.0
    %v2478 = vand.u32 %v2037, 4294901760
    %v2479 = vsub.f32 %v2037, %v2478
    %v2480 = vand.u32 %v2479, 4294901760
    %2481 = vmatpush1.msra.mxu0 %v2480
    %2482 = vmatprep.subr.mxu0 0.0
    %v2483 = vand.u32 %v2038, 4294901760
    %v2484 = vsub.f32 %v2038, %v2483
    %v2485 = vand.u32 %v2484, 4294901760
    %2486 = vmatpush1.msra.mxu0 %v2485
    %2487 = vmatprep.subr.mxu0 0.0
    %v2488 = vand.u32 %v2039, 4294901760
    %v2489 = vsub.f32 %v2039, %v2488
    %v2490 = vand.u32 %v2489, 4294901760
    %2491 = vmatpush1.msra.mxu0 %v2490
    %2492 = vmatprep.subr.mxu0 0.0
    %2493 = vmatpush1.msra.mxu0 0.0
    %2494 = vmatprep.subr.mxu0 0.0
    %2495 = vmatpush1.msra.mxu0 0.0
    %2496 = vmatprep.subr.mxu0 0.0
    %2497 = vmatpush1.msra.mxu0 0.0
    %2498 = vmatprep.subr.mxu0 0.0
    %2499 = vmatpush1.msra.mxu0 0.0
    %2500 = vmatprep.subr.mxu0 0.0
    %2501 = vmatpush1.msra.mxu0 0.0
    %2502 = vmatprep.subr.mxu0 0.0
    %2503 = vmatpush1.msra.mxu0 0.0
    %2504 = vmatprep.subr.mxu0 0.0
    %2505 = vmatpush1.msra.mxu0 0.0
    %2506 = vmatprep.subr.mxu0 0.0
    %2507 = vmatpush1.msra.mxu0 0.0
    %2508 = vmatprep.subr.mxu0 0.0
    %2509 = vmatpush1.msra.mxu0 0.0
    %2510 = vmatprep.subr.mxu0 0.0
    %2511 = vmatpush1.msra.mxu0 0.0
    %2512 = vmatprep.subr.mxu0 0.0
    %2513 = vmatpush1.msra.mxu0 0.0
    %2514 = vmatprep.subr.mxu0 0.0
    %2515 = vmatpush1.msra.mxu0 0.0
    %2516 = vmatprep.subr.mxu0 0.0
    %2517 = vmatpush1.msra.mxu0 0.0
    %2518 = vmatprep.subr.mxu0 0.0
    %2519 = vmatpush1.msra.mxu0 0.0
    %2520 = vmatprep.subr.mxu0 0.0
    %2521 = vmatpush1.msra.mxu0 0.0
    %2522 = vmatprep.subr.mxu0 0.0
    %2523 = vmatpush1.msra.mxu0 0.0
    %2524 = vmatprep.subr.mxu0 0.0
    %2525 = vmatpush1.msra.mxu0 0.0
    %2526 = vmatprep.subr.mxu0 0.0
    %2527 = vmatpush1.msra.mxu0 0.0
    %2528 = vmatprep.subr.mxu0 0.0
    %2529 = vmatpush1.msra.mxu0 0.0
    %2530 = vmatprep.subr.mxu0 0.0
    %2531 = vmatpush1.msra.mxu0 0.0
    %2532 = vmatprep.subr.mxu0 0.0
    %2533 = vmatpush1.msra.mxu0 0.0
    %2534 = vmatprep.subr.mxu0 0.0
    %2535 = vmatpush1.msra.mxu0 0.0
    %2536 = vmatprep.subr.mxu0 0.0
    %2537 = vmatpush1.msra.mxu0 0.0
    %2538 = vmatprep.subr.mxu0 0.0
    %2539 = vmatpush1.msra.mxu0 0.0
    %2540 = vmatprep.subr.mxu0 0.0
    %2541 = vmatpush1.msra.mxu0 0.0
    %2542 = vmatprep.subr.mxu0 0.0
    %2543 = vmatpush1.msra.mxu0 0.0
    %2544 = vmatprep.subr.mxu0 0.0
    %2545 = vmatpush1.msra.mxu0 0.0
    %2546 = vmatprep.subr.mxu0 0.0
    %2547 = vmatpush1.msra.mxu0 0.0
    %2548 = vmatprep.mubr.f32.mxu0 0.0
    %v2549 = vand.u32 %v2041, 4294901760
    %2550 = vmatmul.mubr.f32.gmra.mrb[0].mxu0 %v2549
    %v2551 = vpop.f32.mrb[0].mxu0
    %v2552 = vadd.f32 %v2445, %v2551
    %v2553 = vpop.f32.mrb[0].mxu0
    %2554 = vmatprep.mubr.f32.mxu0 0.0
    %v2555 = vand.u32 %v2044, 4294901760
    %2556 = vmatmul.mubr.f32.gmra.mrb[0].mxu0 %v2555
    %v2557 = vpop.f32.mrb[0].mxu0
    %v2558 = vadd.f32 %v2453, %v2557
    %v2559 = vpop.f32.mrb[0].mxu0
    %2560 = vmatprep.mubr.f32.mxu0 0.0
    %v2561 = vand.u32 %v2047, 4294901760
    %2562 = vmatmul.mubr.f32.gmra.mrb[0].mxu0 %v2561
    %v2563 = vpop.f32.mrb[0].mxu0
    %v2564 = vadd.f32 %v2461, %v2563
    %v2565 = vpop.f32.mrb[0].mxu0
    %2566 = vmatprep.mubr.f32.mxu0 0.0
    %v2567 = vand.u32 %v2050, 4294901760
    %2568 = vmatmul.mubr.f32.gmra.mrb[0].mxu0 %v2567
    %v2569 = vpop.f32.mrb[0].mxu0
    %v2570 = vadd.f32 %v2469, %v2569
    %v2571 = vpop.f32.mrb[0].mxu0
    %2572 = vdwg.mxu0
    %2573 = vmatprep.subr.mxu0 0.0
    %v2574 = vand.u32 %v2036, 4294901760
    %2575 = vmatpush1.msra.mxu0 %v2574
    %2576 = vmatprep.subr.mxu0 0.0
    %v2577 = vand.u32 %v2037, 4294901760
    %2578 = vmatpush1.msra.mxu0 %v2577
    %2579 = vmatprep.subr.mxu0 0.0
    %v2580 = vand.u32 %v2038, 4294901760
    %2581 = vmatpush1.msra.mxu0 %v2580
    %2582 = vmatprep.subr.mxu0 0.0
    %v2583 = vand.u32 %v2039, 4294901760
    %2584 = vmatpush1.msra.mxu0 %v2583
    %2585 = vmatprep.subr.mxu0 0.0
    %2586 = vmatpush1.msra.mxu0 0.0
    %2587 = vmatprep.subr.mxu0 0.0
    %2588 = vmatpush1.msra.mxu0 0.0
    %2589 = vmatprep.subr.mxu0 0.0
    %2590 = vmatpush1.msra.mxu0 0.0
    %2591 = vmatprep.subr.mxu0 0.0
    %2592 = vmatpush1.msra.mxu0 0.0
    %2593 = vmatprep.subr.mxu0 0.0
    %2594 = vmatpush1.msra.mxu0 0.0
    %2595 = vmatprep.subr.mxu0 0.0
    %2596 = vmatpush1.msra.mxu0 0.0
    %2597 = vmatprep.subr.mxu0 0.0
    %2598 = vmatpush1.msra.mxu0 0.0
    %2599 = vmatprep.subr.mxu0 0.0
    %2600 = vmatpush1.msra.mxu0 0.0
    %2601 = vmatprep.subr.mxu0 0.0
    %2602 = vmatpush1.msra.mxu0 0.0
    %2603 = vmatprep.subr.mxu0 0.0
    %2604 = vmatpush1.msra.mxu0 0.0
    %2605 = vmatprep.subr.mxu0 0.0
    %2606 = vmatpush1.msra.mxu0 0.0
    %2607 = vmatprep.subr.mxu0 0.0
    %2608 = vmatpush1.msra.mxu0 0.0
    %2609 = vmatprep.subr.mxu0 0.0
    %2610 = vmatpush1.msra.mxu0 0.0
    %2611 = vmatprep.subr.mxu0 0.0
    %2612 = vmatpush1.msra.mxu0 0.0
    %2613 = vmatprep.subr.mxu0 0.0
    %2614 = vmatpush1.msra.mxu0 0.0
    %2615 = vmatprep.subr.mxu0 0.0
    %2616 = vmatpush1.msra.mxu0 0.0
    %2617 = vmatprep.subr.mxu0 0.0
    %2618 = vmatpush1.msra.mxu0 0.0
    %2619 = vmatprep.subr.mxu0 0.0
    %2620 = vmatpush1.msra.mxu0 0.0
    %2621 = vmatprep.subr.mxu0 0.0
    %2622 = vmatpush1.msra.mxu0 0.0
    %2623 = vmatprep.subr.mxu0 0.0
    %2624 = vmatpush1.msra.mxu0 0.0
    %2625 = vmatprep.subr.mxu0 0.0
    %2626 = vmatpush1.msra.mxu0 0.0
    %2627 = vmatprep.subr.mxu0 0.0
    %2628 = vmatpush1.msra.mxu0 0.0
    %2629 = vmatprep.subr.mxu0 0.0
    %2630 = vmatpush1.msra.mxu0 0.0
    %2631 = vmatprep.subr.mxu0 0.0
    %2632 = vmatpush1.msra.mxu0 0.0
    %2633 = vmatprep.subr.mxu0 0.0
    %2634 = vmatpush1.msra.mxu0 0.0
    %2635 = vmatprep.subr.mxu0 0.0
    %2636 = vmatpush1.msra.mxu0 0.0
    %2637 = vmatprep.subr.mxu0 0.0
    %2638 = vmatpush1.msra.mxu0 0.0
    %2639 = vmatprep.subr.mxu0 0.0
    %2640 = vmatpush1.msra.mxu0 0.0
    %2641 = vmatprep.mubr.f32.mxu0 0.0
    %v2642 = vand.u32 %v2041, 4294901760
    %2643 = vmatmul.mubr.f32.gmra.mrb[0].mxu0 %v2642
    %v2644 = vpop.f32.mrb[0].mxu0
    %v2645 = vadd.f32 %v2552, %v2644
    %v2646 = vpop.f32.mrb[0].mxu0
    %2647 = vmatprep.mubr.f32.mxu0 0.0
    %v2648 = vand.u32 %v2044, 4294901760
    %2649 = vmatmul.mubr.f32.gmra.mrb[0].mxu0 %v2648
    %v2650 = vpop.f32.mrb[0].mxu0
    %v2651 = vadd.f32 %v2558, %v2650
    %v2652 = vpop.f32.mrb[0].mxu0
    %2653 = vmatprep.mubr.f32.mxu0 0.0
    %v2654 = vand.u32 %v2047, 4294901760
    %2655 = vmatmul.mubr.f32.gmra.mrb[0].mxu0 %v2654
    %v2656 = vpop.f32.mrb[0].mxu0
    %v2657 = vadd.f32 %v2564, %v2656
    %v2658 = vpop.f32.mrb[0].mxu0
    %2659 = vmatprep.mubr.f32.mxu0 0.0
    %v2660 = vand.u32 %v2050, 4294901760
    %2661 = vmatmul.mubr.f32.gmra.mrb[0].mxu0 %v2660
    %v2662 = vpop.f32.mrb[0].mxu0
    %v2663 = vadd.f32 %v2570, %v2662
    %v2664 = vpop.f32.mrb[0].mxu0
    %2665 = vdwg.mxu0
    %v2666 = vsel %vm81, %v2645, 0.0
    %2667 = vadd.xlane.f32.xlu0 %v2666
    %v2668 = vpop.xlane.xlu0 %2667
    %v2669 = vsel %vm81, %v2651, 0.0
    %2670 = vadd.xlane.f32.xlu0 %v2669
    %v2671 = vpop.xlane.xlu0 %2670
    %v2672 = vsel %vm81, %v2657, 0.0
    %2673 = vadd.xlane.f32.xlu0 %v2672
    %v2674 = vpop.xlane.xlu0 %2673
    %v2675 = vsel %vm81, %v2663, 0.0
    %2676 = vadd.xlane.f32.xlu0 %v2675
    %v2677 = vpop.xlane.xlu0 %2676
    %v2678 = vrcp.pop 32.0
    %v2679 = vmul.f32 %v2668, %v2678
    %v2680 = vmul.f32 %v2671, %v2678
    %v2681 = vmul.f32 %v2674, %v2678
    %v2682 = vmul.f32 %v2677, %v2678
    %v2683 = vsub.f32 %v2645, %v2679
    %v2684 = vsub.f32 %v2651, %v2680
    %v2685 = vsub.f32 %v2657, %v2681
    %v2686 = vsub.f32 %v2663, %v2682
    %v2687 = vmul.f32 %v2683, %v2683
    %v2688 = vmul.f32 %v2684, %v2684
    %v2689 = vmul.f32 %v2685, %v2685
    %v2690 = vmul.f32 %v2686, %v2686
    %v2691 = vsel %vm81, %v2687, 0.0
    %2692 = vadd.xlane.f32.xlu0 %v2691
    %v2693 = vpop.xlane.xlu0 %2692
    %v2694 = vsel %vm81, %v2688, 0.0
    %2695 = vadd.xlane.f32.xlu0 %v2694
    %v2696 = vpop.xlane.xlu0 %2695
    %v2697 = vsel %vm81, %v2689, 0.0
    %2698 = vadd.xlane.f32.xlu0 %v2697
    %v2699 = vpop.xlane.xlu0 %2698
    %v2700 = vsel %vm81, %v2690, 0.0
    %2701 = vadd.xlane.f32.xlu0 %v2700
    %v2702 = vpop.xlane.xlu0 %2701
    %v2703 = vmul.f32 %v2693, %v2678
    %v2704 = vmul.f32 %v2696, %v2678
    %v2705 = vmul.f32 %v2699, %v2678
    %v2706 = vmul.f32 %v2702, %v2678
    %v2707 = vadd.f32 %v2703, 1e-05
    %v2708 = vadd.f32 %v2704, 1e-05
    %v2709 = vadd.f32 %v2705, 1e-05
    %v2710 = vadd.f32 %v2706, 1e-05
    %v2711 = vrsqrt.pop %v2707
    %v2712 = vrsqrt.pop %v2708
    %v2713 = vrsqrt.pop %v2709
    %v2714 = vrsqrt.pop %v2710
    %v2715 = vmul.f32 %v2683, %v2711
    %v2716 = vmul.f32 %v2684, %v2712
    %v2717 = vmul.f32 %v2685, %v2713
    %v2718 = vmul.f32 %v2686, %v2714
    %2719 = vst.msk [vmem:[#allocation10] sm:$0xff] %vm81, %v2715
    %2720 = vst.msk [vmem:[#allocation10 + $0x8] sm:$0xff] %vm81, %v2716
    %2721 = vst.msk [vmem:[#allocation10 + $0x10] sm:$0xff] %vm81, %v2717
    %2722 = vst.msk [vmem:[#allocation10 + $0x18] sm:$0xff] %vm81, %v2718
    // Predicated region
    $region34: #{attention_layer_b.1} parent=1 // pred_check
      _
    $region35: #{attention_layer_b.1} parent=1 // pred_check_branch
      %2724 = sbr.rel (0) target = $region37
    $region36: #{attention_layer_b.1} parent=1 // pred_region
      %s2726 = ssub.s32 512, 512
      %2727 = vsyncadd [#allocation4], %s2726
      %s2728 = sshll.u32 [#allocation10], 4
      %s2729 = int_to_ptr.vmem [resolvable:$true] %s2728
      %2734 = dma.vmem_to_hbm [thread:$0]  %s2729, 512, %s4, [#allocation4], 128, 128, 8
    $region37: #{attention_layer_b.1} parent=1 // pred_fallthru
      _
    // Predicated region
    $region38: #{attention_layer_b.1} parent=1 // pred_check
      _
    $region39: #{attention_layer_b.1} parent=1 // pred_check_branch
      %2736 = sbr.rel (0) target = $region41
    $region40: #{attention_layer_b.1} parent=1 // pred_region
      %2737 = dma.done [#allocation4], 512
    $region41: #{attention_layer_b.1} parent=1 // pred_fallthru
      _
    %2738 = vsyncpa [#allocation3], 1
    %2739 = vsyncpa [#allocation6], 1
    %2740 = vsyncpa [#allocation9], 1
    %2741 = vsyncpa [#allocation4], 1

</llo_original>
